<compile_context>
chip_gen: v7x
topology: tpu7x:2x2x1
jax: 0.10.0
libtpu: 0.0.40
codegen_flags: <defaults>
</compile_context>

<pallas_src>
import functools

import jax
import jax.numpy as jnp
import numpy as np
from jax import lax
from jax.experimental import pallas as pl
from jax.experimental.pallas import tpu as pltpu


def _layernorm(x, gamma, beta, eps=1e-5):
    mu = jnp.mean(x, axis=-1, keepdims=True)
    var = jnp.mean((x - mu) ** 2, axis=-1, keepdims=True)
    return (x - mu) * lax.rsqrt(var + eps) * gamma + beta


def decoder_layer_kernel(
    x_ref,
    wqkv_ref, bqkv_ref,         # fused QKV: (D, 3D) bf16, (1, 3D) f32
    wo_ref, bo_ref,             # (n_head, hd, D) bf16, (1, D) f32
    g1_ref, be1_ref,            # LayerNorm 1
    w1_ref, bf1_ref,            # FFN up   (D, tdff) bf16, (1, tdff) f32
    w2_ref, bf2_ref,            # FFN down (tdff, D) bf16, (1, D) f32
    g2_ref, be2_ref,            # LayerNorm 2
    o_ref,
    qh_scr, kh_scr, vh_scr,     # (n_head, S, hd) bf16 scratch
    y_scr,                      # (S, D) f32  : post-LN1 activations
    y_bf_scr,                   # (S, D) bf16 : cached bf16 copy for the FFN
    acc_scr,                    # (S, D) f32  : streamed FFN accumulator
    *, n_head: int,
):
    f_idx = pl.program_id(1)            # Dff-chunk index (reduction axis)
    n_f = pl.num_programs(1)
    S = x_ref.shape[1]
    D = x_ref.shape[2]
    hd = D // n_head

    # ---------- step 0: attention + residual + LayerNorm1, init FFN acc ------
    @pl.when(f_idx == 0)
    def _attention():
        x = x_ref[0].astype(jnp.float32)                     # (S, D)
        x_bf = x.astype(jnp.bfloat16)

        # Fused QKV projection: one MXU launch, 3x wider N.
        qkv = jnp.dot(x_bf, wqkv_ref[...],
                      preferred_element_type=jnp.float32) + bqkv_ref[0]  # (S, 3D)

        # Scatter heads into (n_head, S, hd) bf16 scratch slices
        # (no last-dim concatenate).
        for h in range(n_head):
            qh_scr[h] = qkv[:, h * hd:(h + 1) * hd].astype(jnp.bfloat16)
            kh_scr[h] = qkv[:, D + h * hd:D + (h + 1) * hd].astype(jnp.bfloat16)
            vh_scr[h] = qkv[:, 2 * D + h * hd:2 * D + (h + 1) * hd].astype(jnp.bfloat16)

        qh = qh_scr[...]
        kh = kh_scr[...]
        vh = vh_scr[...]

        scale = 1.0 / float(np.sqrt(hd))
        # Batched-over-heads score matmul (leading batch dim -> clean MXU dot).
        s = jnp.einsum('hqd,hkd->hqk', qh, kh,
                       preferred_element_type=jnp.float32) * scale       # (h,S,S)

        row = lax.broadcasted_iota(jnp.int32, (S, S), 0)
        col = lax.broadcasted_iota(jnp.int32, (S, S), 1)
        causal = (row >= col)[None, :, :]                                # (1,S,S)
        s = jnp.where(causal, s, -1e30)

        s = s - jnp.max(s, axis=-1, keepdims=True)
        p = jnp.exp(s)
        p = p * pl.reciprocal(jnp.sum(p, axis=-1, keepdims=True), approx=True)

        ah = jnp.einsum('hqk,hkd->hqd', p.astype(jnp.bfloat16), vh,
                        preferred_element_type=jnp.float32)              # (h,S,hd)

        # Per-head output projection, summed over heads (wo pre-split on host).
        oh = jnp.einsum('hqd,hde->hqe', ah.astype(jnp.bfloat16), wo_ref[...],
                        preferred_element_type=jnp.float32)              # (h,S,D)
        attn = jnp.sum(oh, axis=0) + bo_ref[0]                           # (S,D)

        y = _layernorm(x + attn, g1_ref[0], be1_ref[0])
        y_scr[...] = y
        y_bf_scr[...] = y.astype(jnp.bfloat16)        # cast once, reuse per chunk
        acc_scr[...] = jnp.zeros_like(acc_scr)

    # ---------- every step: one streamed FFN chunk ----------------------------
    h1 = jnp.dot(y_bf_scr[...], w1_ref[...],
                 preferred_element_type=jnp.float32) + bf1_ref[0]        # (S, tdff)
    h1 = jnp.maximum(h1, 0.0)
    acc_scr[...] += jnp.dot(h1.astype(jnp.bfloat16), w2_ref[...],
                            preferred_element_type=jnp.float32)          # (S, D)

    # ---------- last step: residual + LayerNorm2, write output ----------------
    @pl.when(f_idx == n_f - 1)
    def _finalize():
        out = _layernorm(y_scr[...] + acc_scr[...] + bf2_ref[0],
                         g2_ref[0], be2_ref[0])
        o_ref[0] = out.astype(o_ref.dtype)


def decoder_layer(x, p, n_head, *, tdff=None):
    B, S, D = x.shape
    Dff = p["w1"].shape[1]
    hd = D // n_head
    assert D % n_head == 0

    if tdff is None:
        tdff = min(Dff, 256)          # 256-aligned chunk (128-multiple, v5e-safe)
    assert Dff % tdff == 0 and (tdff % 128 == 0 or tdff == Dff)
    n_f = Dff // tdff

    bf16 = jnp.bfloat16
    # Host-side weight packing: fused QKV, per-head reshaped output projection,
    # bf16 operands (f32 accumulation happens on the MXU).
    wqkv = jnp.concatenate([p["wq"], p["wk"], p["wv"]], axis=1).astype(bf16)
    bqkv = jnp.concatenate([p["bq"], p["bk"], p["bv"]], axis=1)
    wo_h = p["wo"].reshape(n_head, hd, D).astype(bf16)
    w1 = p["w1"].astype(bf16)
    w2 = p["w2"].astype(bf16)

    const2 = lambda shape: pl.BlockSpec(shape, lambda b, f: (0, 0))
    in_specs = [
        pl.BlockSpec((1, S, D), lambda b, f: (b, 0, 0)),         # x
        const2((D, 3 * D)),                                      # wqkv (fused)
        const2((1, 3 * D)),                                      # bqkv
        pl.BlockSpec((n_head, hd, D), lambda b, f: (0, 0, 0)),   # wo per head
        const2((1, D)),                                          # bo
        const2((1, D)), const2((1, D)),                          # ln1 gamma/beta
        pl.BlockSpec((D, tdff), lambda b, f: (0, f)),            # W1 chunk
        pl.BlockSpec((1, tdff), lambda b, f: (0, f)),            # b1 chunk
        pl.BlockSpec((tdff, D), lambda b, f: (f, 0)),            # W2 chunk
        const2((1, D)),                                          # b2
        const2((1, D)), const2((1, D)),                          # ln2 gamma/beta
    ]

    flops = (2 * B * S * D * 3 * D          # fused QKV
             + 4 * B * S * S * D            # QK^T + PV over all heads
             + 2 * B * S * D * D            # output projection
             + 4 * B * S * D * Dff)         # FFN up + down
    transcendentals = B * n_head * S * S + 4 * B * S
    bytes_accessed = (2 * B * S * D * 4
                      + (3 * D * D + D * D + 2 * D * Dff) * 2
                      + (4 * D + Dff + 5 * D) * 4)

    kernel = functools.partial(decoder_layer_kernel, n_head=n_head)
    return pl.pallas_call(
        kernel,
        out_shape=jax.ShapeDtypeStruct((B, S, D), x.dtype),
        grid_spec=pltpu.PrefetchScalarGridSpec(
            num_scalar_prefetch=0,
            grid=(B, n_f),
            in_specs=in_specs,
            out_specs=pl.BlockSpec((1, S, D), lambda b, f: (b, 0, 0)),
            scratch_shapes=[
                pltpu.VMEM((n_head, S, hd), jnp.bfloat16),   # q heads
                pltpu.VMEM((n_head, S, hd), jnp.bfloat16),   # k heads
                pltpu.VMEM((n_head, S, hd), jnp.bfloat16),   # v heads
                pltpu.VMEM((S, D), jnp.float32),             # y (post LN1, f32)
                pltpu.VMEM((S, D), jnp.bfloat16),            # y (post LN1, bf16)
                pltpu.VMEM((S, D), jnp.float32),             # ffn accumulator
            ],
        ),
        compiler_params=pltpu.CompilerParams(
            dimension_semantics=("parallel", "arbitrary"),
            vmem_limit_bytes=48 * 1024 * 1024,
        ),
        cost_estimate=pl.CostEstimate(
            flops=int(flops),
            transcendentals=int(transcendentals),
            bytes_accessed=int(bytes_accessed)),
    )(
        x,
        wqkv, bqkv, wo_h, p["bo"],
        p["g1"], p["be1"],
        w1, p["bf1"], w2, p["bf2"],
        p["g2"], p["be2"],
    )


def decoder(x, layer_params, n_head):
    """Decoder: stack of num_layers decoder layers."""
    for p in layer_params:
        x = decoder_layer(x, p, n_head)
    return x


# ------------------------------ reference ------------------------------------
def reference_layer(x, p, n_head):
    """Plain-JAX reference mirroring the kernel's bf16-operand / f32-accumulate
    matmul policy (softmax / LayerNorm in f32)."""
    bf16, f32 = jnp.bfloat16, jnp.float32

    def mm(a, w):
        return jnp.dot(a.astype(bf16), w.astype(bf16), preferred_element_type=f32)

    B, S, D = x.shape
    hd = D // n_head
    q = mm(x, p["wq"]) + p["bq"][0]
    k = mm(x, p["wk"]) + p["bk"][0]
    v = mm(x, p["wv"]) + p["bv"][0]

    def split(t):
        return t.reshape(B, S, n_head, hd).transpose(0, 2, 1, 3)

    qh, kh, vh = split(q), split(k), split(v)
    s = jnp.einsum("bhqd,bhkd->bhqk", qh.astype(bf16), kh.astype(bf16),
                   preferred_element_type=f32) / np.sqrt(hd)
    mask = np.tril(np.ones((S, S), dtype=bool))
    s = jnp.where(mask, s, -1e30)
    a = jax.nn.softmax(s, axis=-1)
    o = jnp.einsum("bhqk,bhkd->bhqd", a.astype(bf16), vh.astype(bf16),
                   preferred_element_type=f32)
    o = o.transpose(0, 2, 1, 3).reshape(B, S, D)
    attn = mm(o, p["wo"]) + p["bo"][0]

    def ln(t, g, b):
        mu = t.mean(-1, keepdims=True)
        var = ((t - mu) ** 2).mean(-1, keepdims=True)
        return (t - mu) / jnp.sqrt(var + 1e-5) * g[0] + b[0]

    y = ln(x + attn, p["g1"], p["be1"])
    h = jnp.maximum(mm(y, p["w1"]) + p["bf1"][0], 0.0)
    ffn = mm(h, p["w2"]) + p["bf2"][0]
    return ln(y + ffn, p["g2"], p["be2"])


def init_layer_params(key, d_model, d_ff):
    ks = jax.random.split(key, 12)
    f32 = jnp.float32

    def w(k, fan_in, shape):
        return jax.random.normal(k, shape, f32) * (1.0 / np.sqrt(fan_in))

    def b(k, shape):
        return 0.1 * jax.random.normal(k, shape, f32)

    return {
        "wq": w(ks[0], d_model, (d_model, d_model)), "bq": b(ks[1], (1, d_model)),
        "wk": w(ks[2], d_model, (d_model, d_model)), "bk": b(ks[3], (1, d_model)),
        "wv": w(ks[4], d_model, (d_model, d_model)), "bv": b(ks[5], (1, d_model)),
        "wo": w(ks[6], d_model, (d_model, d_model)), "bo": b(ks[7], (1, d_model)),
        "g1": jnp.ones((1, d_model), f32), "be1": jnp.zeros((1, d_model), f32),
        "w1": w(ks[8], d_model, (d_model, d_ff)), "bf1": b(ks[9], (1, d_ff)),
        "w2": w(ks[10], d_ff, (d_ff, d_model)), "bf2": b(ks[11], (1, d_model)),
        "g2": jnp.ones((1, d_model), f32), "be2": jnp.zeros((1, d_model), f32),
    }


if __name__ == "__main__":
    n_head, d_model, num_layers = 4, 128, 2     # lane-aligned d_model
    B, S = 2, 16
    d_ff = 4 * d_model                           # 512 -> 2 streamed Dff chunks

    key = jax.random.PRNGKey(0)
    key, xkey = jax.random.split(key)
    layer_keys = jax.random.split(key, num_layers)
    params = [init_layer_params(k, d_model, d_ff) for k in layer_keys]
    x = jax.random.normal(xkey, (B, S, d_model), jnp.float32)

    out = decoder(x, params, n_head)
    out = jax.block_until_ready(out)

    ref = x
    for p in params:
        ref = reference_layer(ref, p, n_head)

    np.testing.assert_allclose(np.asarray(out), np.asarray(ref),
                               rtol=2e-2, atol=2e-2)
    print("KERNEL_OK")
</pallas_src>

<mosaic_0001>
module attributes {stable_mosaic.version = 11 : i64} {
  func.func @decoder_layer_kernel(%arg0: i32, %arg1: i32, %arg2: memref<1x16x128xf32, #tpu.memory_space<vmem>>, %arg3: memref<128x384xbf16, #tpu.memory_space<vmem>>, %arg4: memref<1x384xf32, #tpu.memory_space<vmem>>, %arg5: memref<4x32x128xbf16, #tpu.memory_space<vmem>>, %arg6: memref<1x128xf32, #tpu.memory_space<vmem>>, %arg7: memref<1x128xf32, #tpu.memory_space<vmem>>, %arg8: memref<1x128xf32, #tpu.memory_space<vmem>>, %arg9: memref<128x256xbf16, #tpu.memory_space<vmem>>, %arg10: memref<1x256xf32, #tpu.memory_space<vmem>>, %arg11: memref<256x128xbf16, #tpu.memory_space<vmem>>, %arg12: memref<1x128xf32, #tpu.memory_space<vmem>>, %arg13: memref<1x128xf32, #tpu.memory_space<vmem>>, %arg14: memref<1x128xf32, #tpu.memory_space<vmem>>, %arg15: memref<1x16x128xf32, #tpu.memory_space<vmem>>, %arg16: memref<4x16x32xbf16, #tpu.memory_space<vmem>>, %arg17: memref<4x16x32xbf16, #tpu.memory_space<vmem>>, %arg18: memref<4x16x32xbf16, #tpu.memory_space<vmem>>, %arg19: memref<16x128xf32, #tpu.memory_space<vmem>>, %arg20: memref<16x128xbf16, #tpu.memory_space<vmem>>, %arg21: memref<16x128xf32, #tpu.memory_space<vmem>>) attributes {dimension_semantics = [#tpu.dimension_semantics<parallel>, #tpu.dimension_semantics<arbitrary>], iteration_bounds = array<i64: 2, 2>, scalar_prefetch = 0 : i64, scratch_operands = 6 : i64, tpu.core_type = #tpu.core_type<tc>, window_params = [{transform_indices = @transform_0, window_bounds = array<i64: 1, 16, 128>}, {pipeline_mode = #tpu.pipeline_mode<synchronous>, transform_indices = @transform_1, window_bounds = array<i64: 128, 384>}, {pipeline_mode = #tpu.pipeline_mode<synchronous>, transform_indices = @transform_2, window_bounds = array<i64: 1, 384>}, {pipeline_mode = #tpu.pipeline_mode<synchronous>, transform_indices = @transform_3, window_bounds = array<i64: 4, 32, 128>}, {pipeline_mode = #tpu.pipeline_mode<synchronous>, transform_indices = @transform_4, window_bounds = array<i64: 1, 128>}, {pipeline_mode = #tpu.pipeline_mode<synchronous>, transform_indices = @transform_5, window_bounds = array<i64: 1, 128>}, {pipeline_mode = #tpu.pipeline_mode<synchronous>, transform_indices = @transform_6, window_bounds = array<i64: 1, 128>}, {transform_indices = @transform_7, window_bounds = array<i64: 128, 256>}, {transform_indices = @transform_8, window_bounds = array<i64: 1, 256>}, {transform_indices = @transform_9, window_bounds = array<i64: 256, 128>}, {pipeline_mode = #tpu.pipeline_mode<synchronous>, transform_indices = @transform_10, window_bounds = array<i64: 1, 128>}, {pipeline_mode = #tpu.pipeline_mode<synchronous>, transform_indices = @transform_11, window_bounds = array<i64: 1, 128>}, {pipeline_mode = #tpu.pipeline_mode<synchronous>, transform_indices = @transform_12, window_bounds = array<i64: 1, 128>}, {transform_indices = @transform_13, window_bounds = array<i64: 1, 16, 128>}]} {
    %c0_i32 = arith.constant 0 : i32
    %0 = arith.cmpi eq, %arg1, %c0_i32 : i32
    %1 = arith.extui %0 : i1 to i32
    %c0_i32_0 = arith.constant 0 : i32
    %2 = arith.cmpi ne, %1, %c0_i32_0 : i32
    scf.if %2 {
      %c0_15 = arith.constant 0 : index
      %c0_16 = arith.constant 0 : index
      %c0_17 = arith.constant 0 : index
      %22 = vector.load %arg2[%c0_15, %c0_16, %c0_17] : memref<1x16x128xf32, #tpu.memory_space<vmem>>, vector<1x16x128xf32>
      %23 = vector.shape_cast %22 : vector<1x16x128xf32> to vector<16x128xf32>
      %24 = arith.truncf %23 : vector<16x128xf32> to vector<16x128xbf16>
      %c0_18 = arith.constant 0 : index
      %c0_19 = arith.constant 0 : index
      %25 = vector.load %arg3[%c0_18, %c0_19] : memref<128x384xbf16, #tpu.memory_space<vmem>>, vector<128x384xbf16>
      %cst_20 = arith.constant dense<0.000000e+00> : vector<16x384xf32>
      %26 = tpu.matmul %24, %25, %cst_20 {dimension_numbers = #tpu.dot_dimension_numbers<[1], [0], [0], [1], [0, 0, 1, 1], [], []>} : vector<16x128xbf16>, vector<128x384xbf16>, vector<16x384xf32> -> vector<16x384xf32>
      %c0_21 = arith.constant 0 : index
      %c0_22 = arith.constant 0 : index
      %27 = vector.load %arg4[%c0_21, %c0_22] : memref<1x384xf32, #tpu.memory_space<vmem>>, vector<1x384xf32>
      %28 = vector.shape_cast %27 : vector<1x384xf32> to vector<384xf32>
      %29 = vector.shape_cast %28 : vector<384xf32> to vector<1x384xf32>
      %30 = vector.broadcast %29 : vector<1x384xf32> to vector<16x384xf32>
      %31 = arith.addf %26, %30 : vector<16x384xf32>
      %32 = vector.extract_strided_slice %31 {offsets = [0, 0], sizes = [16, 32], strides = [1, 1]} : vector<16x384xf32> to vector<16x32xf32>
      %33 = arith.truncf %32 : vector<16x32xf32> to vector<16x32xbf16>
      %c0_23 = arith.constant 0 : index
      %c0_24 = arith.constant 0 : index
      %c0_25 = arith.constant 0 : index
      %34 = vector.load %arg16[%c0_23, %c0_24, %c0_25] : memref<4x16x32xbf16, #tpu.memory_space<vmem>>, vector<1x16x32xbf16>
      %35 = vector.shape_cast %34 : vector<1x16x32xbf16> to vector<16x32xbf16>
      %36 = vector.shape_cast %33 : vector<16x32xbf16> to vector<1x16x32xbf16>
      tpu.vector_store %arg16[%c0_23, %c0_24, %c0_25], %36 {strides = array<i32>} : memref<4x16x32xbf16, #tpu.memory_space<vmem>>, vector<1x16x32xbf16>,
      %37 = vector.extract_strided_slice %31 {offsets = [0, 128], sizes = [16, 32], strides = [1, 1]} : vector<16x384xf32> to vector<16x32xf32>
      %38 = arith.truncf %37 : vector<16x32xf32> to vector<16x32xbf16>
      %c0_26 = arith.constant 0 : index
      %c0_27 = arith.constant 0 : index
      %c0_28 = arith.constant 0 : index
      %39 = vector.load %arg17[%c0_26, %c0_27, %c0_28] : memref<4x16x32xbf16, #tpu.memory_space<vmem>>, vector<1x16x32xbf16>
      %40 = vector.shape_cast %39 : vector<1x16x32xbf16> to vector<16x32xbf16>
      %41 = vector.shape_cast %38 : vector<16x32xbf16> to vector<1x16x32xbf16>
      tpu.vector_store %arg17[%c0_26, %c0_27, %c0_28], %41 {strides = array<i32>} : memref<4x16x32xbf16, #tpu.memory_space<vmem>>, vector<1x16x32xbf16>,
      %42 = vector.extract_strided_slice %31 {offsets = [0, 256], sizes = [16, 32], strides = [1, 1]} : vector<16x384xf32> to vector<16x32xf32>
      %43 = arith.truncf %42 : vector<16x32xf32> to vector<16x32xbf16>
      %c0_29 = arith.constant 0 : index
      %c0_30 = arith.constant 0 : index
      %c0_31 = arith.constant 0 : index
      %44 = vector.load %arg18[%c0_29, %c0_30, %c0_31] : memref<4x16x32xbf16, #tpu.memory_space<vmem>>, vector<1x16x32xbf16>
      %45 = vector.shape_cast %44 : vector<1x16x32xbf16> to vector<16x32xbf16>
      %46 = vector.shape_cast %43 : vector<16x32xbf16> to vector<1x16x32xbf16>
      tpu.vector_store %arg18[%c0_29, %c0_30, %c0_31], %46 {strides = array<i32>} : memref<4x16x32xbf16, #tpu.memory_space<vmem>>, vector<1x16x32xbf16>,
      %47 = vector.extract_strided_slice %31 {offsets = [0, 32], sizes = [16, 32], strides = [1, 1]} : vector<16x384xf32> to vector<16x32xf32>
      %48 = arith.truncf %47 : vector<16x32xf32> to vector<16x32xbf16>
      %c1 = arith.constant 1 : index
      %c0_32 = arith.constant 0 : index
      %c0_33 = arith.constant 0 : index
      %49 = vector.load %arg16[%c1, %c0_32, %c0_33] : memref<4x16x32xbf16, #tpu.memory_space<vmem>>, vector<1x16x32xbf16>
      %50 = vector.shape_cast %49 : vector<1x16x32xbf16> to vector<16x32xbf16>
      %51 = vector.shape_cast %48 : vector<16x32xbf16> to vector<1x16x32xbf16>
      tpu.vector_store %arg16[%c1, %c0_32, %c0_33], %51 {strides = array<i32>} : memref<4x16x32xbf16, #tpu.memory_space<vmem>>, vector<1x16x32xbf16>,
      %52 = vector.extract_strided_slice %31 {offsets = [0, 160], sizes = [16, 32], strides = [1, 1]} : vector<16x384xf32> to vector<16x32xf32>
      %53 = arith.truncf %52 : vector<16x32xf32> to vector<16x32xbf16>
      %c1_34 = arith.constant 1 : index
      %c0_35 = arith.constant 0 : index
      %c0_36 = arith.constant 0 : index
      %54 = vector.load %arg17[%c1_34, %c0_35, %c0_36] : memref<4x16x32xbf16, #tpu.memory_space<vmem>>, vector<1x16x32xbf16>
      %55 = vector.shape_cast %54 : vector<1x16x32xbf16> to vector<16x32xbf16>
      %56 = vector.shape_cast %53 : vector<16x32xbf16> to vector<1x16x32xbf16>
      tpu.vector_store %arg17[%c1_34, %c0_35, %c0_36], %56 {strides = array<i32>} : memref<4x16x32xbf16, #tpu.memory_space<vmem>>, vector<1x16x32xbf16>,
      %57 = vector.extract_strided_slice %31 {offsets = [0, 288], sizes = [16, 32], strides = [1, 1]} : vector<16x384xf32> to vector<16x32xf32>
      %58 = arith.truncf %57 : vector<16x32xf32> to vector<16x32xbf16>
      %c1_37 = arith.constant 1 : index
      %c0_38 = arith.constant 0 : index
      %c0_39 = arith.constant 0 : index
      %59 = vector.load %arg18[%c1_37, %c0_38, %c0_39] : memref<4x16x32xbf16, #tpu.memory_space<vmem>>, vector<1x16x32xbf16>
      %60 = vector.shape_cast %59 : vector<1x16x32xbf16> to vector<16x32xbf16>
      %61 = vector.shape_cast %58 : vector<16x32xbf16> to vector<1x16x32xbf16>
      tpu.vector_store %arg18[%c1_37, %c0_38, %c0_39], %61 {strides = array<i32>} : memref<4x16x32xbf16, #tpu.memory_space<vmem>>, vector<1x16x32xbf16>,
      %62 = vector.extract_strided_slice %31 {offsets = [0, 64], sizes = [16, 32], strides = [1, 1]} : vector<16x384xf32> to vector<16x32xf32>
      %63 = arith.truncf %62 : vector<16x32xf32> to vector<16x32xbf16>
      %c2 = arith.constant 2 : index
      %c0_40 = arith.constant 0 : index
      %c0_41 = arith.constant 0 : index
      %64 = vector.load %arg16[%c2, %c0_40, %c0_41] : memref<4x16x32xbf16, #tpu.memory_space<vmem>>, vector<1x16x32xbf16>
      %65 = vector.shape_cast %64 : vector<1x16x32xbf16> to vector<16x32xbf16>
      %66 = vector.shape_cast %63 : vector<16x32xbf16> to vector<1x16x32xbf16>
      tpu.vector_store %arg16[%c2, %c0_40, %c0_41], %66 {strides = array<i32>} : memref<4x16x32xbf16, #tpu.memory_space<vmem>>, vector<1x16x32xbf16>,
      %67 = vector.extract_strided_slice %31 {offsets = [0, 192], sizes = [16, 32], strides = [1, 1]} : vector<16x384xf32> to vector<16x32xf32>
      %68 = arith.truncf %67 : vector<16x32xf32> to vector<16x32xbf16>
      %c2_42 = arith.constant 2 : index
      %c0_43 = arith.constant 0 : index
      %c0_44 = arith.constant 0 : index
      %69 = vector.load %arg17[%c2_42, %c0_43, %c0_44] : memref<4x16x32xbf16, #tpu.memory_space<vmem>>, vector<1x16x32xbf16>
      %70 = vector.shape_cast %69 : vector<1x16x32xbf16> to vector<16x32xbf16>
      %71 = vector.shape_cast %68 : vector<16x32xbf16> to vector<1x16x32xbf16>
      tpu.vector_store %arg17[%c2_42, %c0_43, %c0_44], %71 {strides = array<i32>} : memref<4x16x32xbf16, #tpu.memory_space<vmem>>, vector<1x16x32xbf16>,
      %72 = vector.extract_strided_slice %31 {offsets = [0, 320], sizes = [16, 32], strides = [1, 1]} : vector<16x384xf32> to vector<16x32xf32>
      %73 = arith.truncf %72 : vector<16x32xf32> to vector<16x32xbf16>
      %c2_45 = arith.constant 2 : index
      %c0_46 = arith.constant 0 : index
      %c0_47 = arith.constant 0 : index
      %74 = vector.load %arg18[%c2_45, %c0_46, %c0_47] : memref<4x16x32xbf16, #tpu.memory_space<vmem>>, vector<1x16x32xbf16>
      %75 = vector.shape_cast %74 : vector<1x16x32xbf16> to vector<16x32xbf16>
      %76 = vector.shape_cast %73 : vector<16x32xbf16> to vector<1x16x32xbf16>
      tpu.vector_store %arg18[%c2_45, %c0_46, %c0_47], %76 {strides = array<i32>} : memref<4x16x32xbf16, #tpu.memory_space<vmem>>, vector<1x16x32xbf16>,
      %77 = vector.extract_strided_slice %31 {offsets = [0, 96], sizes = [16, 32], strides = [1, 1]} : vector<16x384xf32> to vector<16x32xf32>
      %78 = arith.truncf %77 : vector<16x32xf32> to vector<16x32xbf16>
      %c3 = arith.constant 3 : index
      %c0_48 = arith.constant 0 : index
      %c0_49 = arith.constant 0 : index
      %79 = vector.load %arg16[%c3, %c0_48, %c0_49] : memref<4x16x32xbf16, #tpu.memory_space<vmem>>, vector<1x16x32xbf16>
      %80 = vector.shape_cast %79 : vector<1x16x32xbf16> to vector<16x32xbf16>
      %81 = vector.shape_cast %78 : vector<16x32xbf16> to vector<1x16x32xbf16>
      tpu.vector_store %arg16[%c3, %c0_48, %c0_49], %81 {strides = array<i32>} : memref<4x16x32xbf16, #tpu.memory_space<vmem>>, vector<1x16x32xbf16>,
      %82 = vector.extract_strided_slice %31 {offsets = [0, 224], sizes = [16, 32], strides = [1, 1]} : vector<16x384xf32> to vector<16x32xf32>
      %83 = arith.truncf %82 : vector<16x32xf32> to vector<16x32xbf16>
      %c3_50 = arith.constant 3 : index
      %c0_51 = arith.constant 0 : index
      %c0_52 = arith.constant 0 : index
      %84 = vector.load %arg17[%c3_50, %c0_51, %c0_52] : memref<4x16x32xbf16, #tpu.memory_space<vmem>>, vector<1x16x32xbf16>
      %85 = vector.shape_cast %84 : vector<1x16x32xbf16> to vector<16x32xbf16>
      %86 = vector.shape_cast %83 : vector<16x32xbf16> to vector<1x16x32xbf16>
      tpu.vector_store %arg17[%c3_50, %c0_51, %c0_52], %86 {strides = array<i32>} : memref<4x16x32xbf16, #tpu.memory_space<vmem>>, vector<1x16x32xbf16>,
      %87 = vector.extract_strided_slice %31 {offsets = [0, 352], sizes = [16, 32], strides = [1, 1]} : vector<16x384xf32> to vector<16x32xf32>
      %88 = arith.truncf %87 : vector<16x32xf32> to vector<16x32xbf16>
      %c3_53 = arith.constant 3 : index
      %c0_54 = arith.constant 0 : index
      %c0_55 = arith.constant 0 : index
      %89 = vector.load %arg18[%c3_53, %c0_54, %c0_55] : memref<4x16x32xbf16, #tpu.memory_space<vmem>>, vector<1x16x32xbf16>
      %90 = vector.shape_cast %89 : vector<1x16x32xbf16> to vector<16x32xbf16>
      %91 = vector.shape_cast %88 : vector<16x32xbf16> to vector<1x16x32xbf16>
      tpu.vector_store %arg18[%c3_53, %c0_54, %c0_55], %91 {strides = array<i32>} : memref<4x16x32xbf16, #tpu.memory_space<vmem>>, vector<1x16x32xbf16>,
      %c0_56 = arith.constant 0 : index
      %c0_57 = arith.constant 0 : index
      %c0_58 = arith.constant 0 : index
      %92 = vector.load %arg16[%c0_56, %c0_57, %c0_58] : memref<4x16x32xbf16, #tpu.memory_space<vmem>>, vector<4x16x32xbf16>
      %c0_59 = arith.constant 0 : index
      %c0_60 = arith.constant 0 : index
      %c0_61 = arith.constant 0 : index
      %93 = vector.load %arg17[%c0_59, %c0_60, %c0_61] : memref<4x16x32xbf16, #tpu.memory_space<vmem>>, vector<4x16x32xbf16>
      %c0_62 = arith.constant 0 : index
      %c0_63 = arith.constant 0 : index
      %c0_64 = arith.constant 0 : index
      %94 = vector.load %arg18[%c0_62, %c0_63, %c0_64] : memref<4x16x32xbf16, #tpu.memory_space<vmem>>, vector<4x16x32xbf16>
      "tpu.trace_start"() <{level = 10 : i32, message = "hqd,hkd->hqk"}> : () -> ()
      %cst_65 = arith.constant dense<0.000000e+00> : vector<4x16x16xf32>
      %95 = tpu.matmul %92, %93, %cst_65 {dimension_numbers = #tpu.dot_dimension_numbers<[2], [2], [1], [1], [0, 0, 0, 1, 1, 1], [0], [0]>} : vector<4x16x32xbf16>, vector<4x16x32xbf16>, vector<4x16x16xf32> -> vector<4x16x16xf32>
      "tpu.trace_stop"() : () -> ()
      %cst_66 = arith.constant 0.176776692 : f32
      %96 = vector.broadcast %cst_66 : f32 to vector<4x16x16xf32>
      %97 = arith.mulf %95, %96 : vector<4x16x16xf32>
      %98 = tpu.iota {dimensions = array<i32: 0>} : vector<16x16xi32>
      %99 = tpu.iota {dimensions = array<i32: 1>} : vector<16x16xi32>
      %100 = arith.cmpi sge, %98, %99 : vector<16x16xi32>
      %101 = vector.shape_cast %100 : vector<16x16xi1> to vector<1x16x16xi1>
      %cst_67 = arith.constant -1.000000e+30 : f32
      %102 = vector.shape_cast %101 : vector<1x16x16xi1> to vector<1x16x16xi1>
      %103 = vector.broadcast %102 : vector<1x16x16xi1> to vector<4x16x16xi1>
      %104 = vector.broadcast %cst_67 : f32 to vector<4x16x16xf32>
      %105 = arith.select %103, %97, %104 : vector<4x16x16xi1>, vector<4x16x16xf32>
      %cst_68 = arith.constant dense<0xFF800000> : vector<4x16xf32>
      %106 = vector.multi_reduction <maximumf>, %105, %cst_68 [2] : vector<4x16x16xf32> to vector<4x16xf32>
      %107 = vector.shape_cast %106 : vector<4x16xf32> to vector<4x16x1xf32>
      %108 = vector.broadcast %107 : vector<4x16x1xf32> to vector<4x16x16xf32>
      %109 = arith.subf %105, %108 : vector<4x16x16xf32>
      %110 = math.exp %109 : vector<4x16x16xf32>
      %cst_69 = arith.constant dense<0.000000e+00> : vector<4x16xf32>
      %111 = vector.multi_reduction <add>, %110, %cst_69 [2] : vector<4x16x16xf32> to vector<4x16xf32>
      %112 = vector.shape_cast %111 : vector<4x16xf32> to vector<4x16x1xf32>
      %113 = tpu.reciprocal %112 {approx = true} : vector<4x16x1xf32> -> vector<4x16x1xf32>
      %114 = vector.broadcast %113 : vector<4x16x1xf32> to vector<4x16x16xf32>
      %115 = arith.mulf %110, %114 : vector<4x16x16xf32>
      %116 = arith.truncf %115 : vector<4x16x16xf32> to vector<4x16x16xbf16>
      "tpu.trace_start"() <{level = 10 : i32, message = "hqk,hkd->hqd"}> : () -> ()
      %cst_70 = arith.constant dense<0.000000e+00> : vector<4x16x32xf32>
      %117 = tpu.matmul %116, %94, %cst_70 {dimension_numbers = #tpu.dot_dimension_numbers<[2], [1], [1], [2], [0, 0, 0, 1, 1, 2], [0], [0]>} : vector<4x16x16xbf16>, vector<4x16x32xbf16>, vector<4x16x32xf32> -> vector<4x16x32xf32>
      "tpu.trace_stop"() : () -> ()
      %118 = arith.truncf %117 : vector<4x16x32xf32> to vector<4x16x32xbf16>
      %c0_71 = arith.constant 0 : index
      %c0_72 = arith.constant 0 : index
      %c0_73 = arith.constant 0 : index
      %119 = vector.load %arg5[%c0_71, %c0_72, %c0_73] : memref<4x32x128xbf16, #tpu.memory_space<vmem>>, vector<4x32x128xbf16>
      "tpu.trace_start"() <{level = 10 : i32, message = "hqd,hde->hqe"}> : () -> ()
      %cst_74 = arith.constant dense<0.000000e+00> : vector<4x16x128xf32>
      %120 = tpu.matmul %118, %119, %cst_74 {dimension_numbers = #tpu.dot_dimension_numbers<[2], [1], [1], [2], [0, 0, 0, 1, 1, 2], [0], [0]>} : vector<4x16x32xbf16>, vector<4x32x128xbf16>, vector<4x16x128xf32> -> vector<4x16x128xf32>
      "tpu.trace_stop"() : () -> ()
      %cst_75 = arith.constant dense<0.000000e+00> : vector<16x128xf32>
      %121 = vector.multi_reduction <add>, %120, %cst_75 [0] : vector<4x16x128xf32> to vector<16x128xf32>
      %c0_76 = arith.constant 0 : index
      %c0_77 = arith.constant 0 : index
      %122 = vector.load %arg6[%c0_76, %c0_77] : memref<1x128xf32, #tpu.memory_space<vmem>>, vector<1x128xf32>
      %123 = vector.shape_cast %122 : vector<1x128xf32> to vector<128xf32>
      %124 = vector.shape_cast %123 : vector<128xf32> to vector<1x128xf32>
      %125 = vector.broadcast %124 : vector<1x128xf32> to vector<16x128xf32>
      %126 = arith.addf %121, %125 : vector<16x128xf32>
      %127 = arith.addf %23, %126 : vector<16x128xf32>
      %c0_78 = arith.constant 0 : index
      %c0_79 = arith.constant 0 : index
      %128 = vector.load %arg7[%c0_78, %c0_79] : memref<1x128xf32, #tpu.memory_space<vmem>>, vector<1x128xf32>
      %129 = vector.shape_cast %128 : vector<1x128xf32> to vector<128xf32>
      %c0_80 = arith.constant 0 : index
      %c0_81 = arith.constant 0 : index
      %130 = vector.load %arg8[%c0_80, %c0_81] : memref<1x128xf32, #tpu.memory_space<vmem>>, vector<1x128xf32>
      %131 = vector.shape_cast %130 : vector<1x128xf32> to vector<128xf32>
      %cst_82 = arith.constant dense<0.000000e+00> : vector<16xf32>
      %132 = vector.multi_reduction <add>, %127, %cst_82 [1] : vector<16x128xf32> to vector<16xf32>
      %133 = vector.shape_cast %132 : vector<16xf32> to vector<16x1xf32>
      %cst_83 = arith.constant 1.280000e+02 : f32
      %134 = vector.broadcast %cst_83 : f32 to vector<16x1xf32>
      %135 = arith.divf %133, %134 : vector<16x1xf32>
      %136 = vector.broadcast %135 : vector<16x1xf32> to vector<16x128xf32>
      %137 = arith.subf %127, %136 : vector<16x128xf32>
      %138 = arith.mulf %137, %137 : vector<16x128xf32>
      %cst_84 = arith.constant dense<0.000000e+00> : vector<16xf32>
      %139 = vector.multi_reduction <add>, %138, %cst_84 [1] : vector<16x128xf32> to vector<16xf32>
      %140 = vector.shape_cast %139 : vector<16xf32> to vector<16x1xf32>
      %cst_85 = arith.constant 1.280000e+02 : f32
      %141 = vector.broadcast %cst_85 : f32 to vector<16x1xf32>
      %142 = arith.divf %140, %141 : vector<16x1xf32>
      %143 = vector.broadcast %135 : vector<16x1xf32> to vector<16x128xf32>
      %144 = arith.subf %127, %143 : vector<16x128xf32>
      %cst_86 = arith.constant 9.99999974E-6 : f32
      %145 = vector.broadcast %cst_86 : f32 to vector<16x1xf32>
      %146 = arith.addf %142, %145 : vector<16x1xf32>
      %147 = math.rsqrt %146 : vector<16x1xf32>
      %148 = vector.broadcast %147 : vector<16x1xf32> to vector<16x128xf32>
      %149 = arith.mulf %144, %148 : vector<16x128xf32>
      %150 = vector.shape_cast %129 : vector<128xf32> to vector<1x128xf32>
      %151 = vector.broadcast %150 : vector<1x128xf32> to vector<16x128xf32>
      %152 = arith.mulf %149, %151 : vector<16x128xf32>
      %153 = vector.shape_cast %131 : vector<128xf32> to vector<1x128xf32>
      %154 = vector.broadcast %153 : vector<1x128xf32> to vector<16x128xf32>
      %155 = arith.addf %152, %154 : vector<16x128xf32>
      %c0_87 = arith.constant 0 : index
      %c0_88 = arith.constant 0 : index
      %156 = vector.load %arg19[%c0_87, %c0_88] : memref<16x128xf32, #tpu.memory_space<vmem>>, vector<16x128xf32>
      tpu.vector_store %arg19[%c0_87, %c0_88], %155 {strides = array<i32>} : memref<16x128xf32, #tpu.memory_space<vmem>>, vector<16x128xf32>,
      %157 = arith.truncf %155 : vector<16x128xf32> to vector<16x128xbf16>
      %c0_89 = arith.constant 0 : index
      %c0_90 = arith.constant 0 : index
      %158 = vector.load %arg20[%c0_89, %c0_90] : memref<16x128xbf16, #tpu.memory_space<vmem>>, vector<16x128xbf16>
      tpu.vector_store %arg20[%c0_89, %c0_90], %157 {strides = array<i32>} : memref<16x128xbf16, #tpu.memory_space<vmem>>, vector<16x128xbf16>,
      %cst_91 = arith.constant 0.000000e+00 : f32
      %159 = vector.broadcast %cst_91 : f32 to vector<16x128xf32>
      %c0_92 = arith.constant 0 : index
      %c0_93 = arith.constant 0 : index
      %160 = vector.load %arg21[%c0_92, %c0_93] : memref<16x128xf32, #tpu.memory_space<vmem>>, vector<16x128xf32>
      tpu.vector_store %arg21[%c0_92, %c0_93], %159 {strides = array<i32>} : memref<16x128xf32, #tpu.memory_space<vmem>>, vector<16x128xf32>,
    } else {
    }
    %c0 = arith.constant 0 : index
    %c0_1 = arith.constant 0 : index
    %3 = vector.load %arg20[%c0, %c0_1] : memref<16x128xbf16, #tpu.memory_space<vmem>>, vector<16x128xbf16>
    %c0_2 = arith.constant 0 : index
    %c0_3 = arith.constant 0 : index
    %4 = vector.load %arg9[%c0_2, %c0_3] : memref<128x256xbf16, #tpu.memory_space<vmem>>, vector<128x256xbf16>
    %cst = arith.constant dense<0.000000e+00> : vector<16x256xf32>
    %5 = tpu.matmul %3, %4, %cst {dimension_numbers = #tpu.dot_dimension_numbers<[1], [0], [0], [1], [0, 0, 1, 1], [], []>} : vector<16x128xbf16>, vector<128x256xbf16>, vector<16x256xf32> -> vector<16x256xf32>
    %c0_4 = arith.constant 0 : index
    %c0_5 = arith.constant 0 : index
    %6 = vector.load %arg10[%c0_4, %c0_5] : memref<1x256xf32, #tpu.memory_space<vmem>>, vector<1x256xf32>
    %7 = vector.shape_cast %6 : vector<1x256xf32> to vector<256xf32>
    %8 = vector.shape_cast %7 : vector<256xf32> to vector<1x256xf32>
    %9 = vector.broadcast %8 : vector<1x256xf32> to vector<16x256xf32>
    %10 = arith.addf %5, %9 : vector<16x256xf32>
    %cst_6 = arith.constant 0.000000e+00 : f32
    %11 = vector.broadcast %cst_6 : f32 to vector<16x256xf32>
    %12 = arith.maximumf %10, %11 : vector<16x256xf32>
    %c0_7 = arith.constant 0 : index
    %c0_8 = arith.constant 0 : index
    %13 = vector.load %arg21[%c0_7, %c0_8] : memref<16x128xf32, #tpu.memory_space<vmem>>, vector<16x128xf32>
    %14 = arith.truncf %12 : vector<16x256xf32> to vector<16x256xbf16>
    %c0_9 = arith.constant 0 : index
    %c0_10 = arith.constant 0 : index
    %15 = vector.load %arg11[%c0_9, %c0_10] : memref<256x128xbf16, #tpu.memory_space<vmem>>, vector<256x128xbf16>
    %cst_11 = arith.constant dense<0.000000e+00> : vector<16x128xf32>
    %16 = tpu.matmul %14, %15, %cst_11 {dimension_numbers = #tpu.dot_dimension_numbers<[1], [0], [0], [1], [0, 0, 1, 1], [], []>} : vector<16x256xbf16>, vector<256x128xbf16>, vector<16x128xf32> -> vector<16x128xf32>
    %17 = arith.addf %13, %16 : vector<16x128xf32>
    %c0_12 = arith.constant 0 : index
    %c0_13 = arith.constant 0 : index
    %18 = vector.load %arg21[%c0_12, %c0_13] : memref<16x128xf32, #tpu.memory_space<vmem>>, vector<16x128xf32>
    tpu.vector_store %arg21[%c0_12, %c0_13], %17 {strides = array<i32>} : memref<16x128xf32, #tpu.memory_space<vmem>>, vector<16x128xf32>,
    %c1_i32 = arith.constant 1 : i32
    %19 = arith.cmpi eq, %arg1, %c1_i32 : i32
    %20 = arith.extui %19 : i1 to i32
    %c0_i32_14 = arith.constant 0 : i32
    %21 = arith.cmpi ne, %20, %c0_i32_14 : i32
    scf.if %21 {
      %c0_15 = arith.constant 0 : index
      %c0_16 = arith.constant 0 : index
      %22 = vector.load %arg19[%c0_15, %c0_16] : memref<16x128xf32, #tpu.memory_space<vmem>>, vector<16x128xf32>
      %c0_17 = arith.constant 0 : index
      %c0_18 = arith.constant 0 : index
      %23 = vector.load %arg21[%c0_17, %c0_18] : memref<16x128xf32, #tpu.memory_space<vmem>>, vector<16x128xf32>
      %24 = arith.addf %22, %23 : vector<16x128xf32>
      %c0_19 = arith.constant 0 : index
      %c0_20 = arith.constant 0 : index
      %25 = vector.load %arg12[%c0_19, %c0_20] : memref<1x128xf32, #tpu.memory_space<vmem>>, vector<1x128xf32>
      %26 = vector.shape_cast %25 : vector<1x128xf32> to vector<128xf32>
      %27 = vector.shape_cast %26 : vector<128xf32> to vector<1x128xf32>
      %28 = vector.broadcast %27 : vector<1x128xf32> to vector<16x128xf32>
      %29 = arith.addf %24, %28 : vector<16x128xf32>
      %c0_21 = arith.constant 0 : index
      %c0_22 = arith.constant 0 : index
      %30 = vector.load %arg13[%c0_21, %c0_22] : memref<1x128xf32, #tpu.memory_space<vmem>>, vector<1x128xf32>
      %31 = vector.shape_cast %30 : vector<1x128xf32> to vector<128xf32>
      %c0_23 = arith.constant 0 : index
      %c0_24 = arith.constant 0 : index
      %32 = vector.load %arg14[%c0_23, %c0_24] : memref<1x128xf32, #tpu.memory_space<vmem>>, vector<1x128xf32>
      %33 = vector.shape_cast %32 : vector<1x128xf32> to vector<128xf32>
      %cst_25 = arith.constant dense<0.000000e+00> : vector<16xf32>
      %34 = vector.multi_reduction <add>, %29, %cst_25 [1] : vector<16x128xf32> to vector<16xf32>
      %35 = vector.shape_cast %34 : vector<16xf32> to vector<16x1xf32>
      %cst_26 = arith.constant 1.280000e+02 : f32
      %36 = vector.broadcast %cst_26 : f32 to vector<16x1xf32>
      %37 = arith.divf %35, %36 : vector<16x1xf32>
      %38 = vector.broadcast %37 : vector<16x1xf32> to vector<16x128xf32>
      %39 = arith.subf %29, %38 : vector<16x128xf32>
      %40 = arith.mulf %39, %39 : vector<16x128xf32>
      %cst_27 = arith.constant dense<0.000000e+00> : vector<16xf32>
      %41 = vector.multi_reduction <add>, %40, %cst_27 [1] : vector<16x128xf32> to vector<16xf32>
      %42 = vector.shape_cast %41 : vector<16xf32> to vector<16x1xf32>
      %cst_28 = arith.constant 1.280000e+02 : f32
      %43 = vector.broadcast %cst_28 : f32 to vector<16x1xf32>
      %44 = arith.divf %42, %43 : vector<16x1xf32>
      %45 = vector.broadcast %37 : vector<16x1xf32> to vector<16x128xf32>
      %46 = arith.subf %29, %45 : vector<16x128xf32>
      %cst_29 = arith.constant 9.99999974E-6 : f32
      %47 = vector.broadcast %cst_29 : f32 to vector<16x1xf32>
      %48 = arith.addf %44, %47 : vector<16x1xf32>
      %49 = math.rsqrt %48 : vector<16x1xf32>
      %50 = vector.broadcast %49 : vector<16x1xf32> to vector<16x128xf32>
      %51 = arith.mulf %46, %50 : vector<16x128xf32>
      %52 = vector.shape_cast %31 : vector<128xf32> to vector<1x128xf32>
      %53 = vector.broadcast %52 : vector<1x128xf32> to vector<16x128xf32>
      %54 = arith.mulf %51, %53 : vector<16x128xf32>
      %55 = vector.shape_cast %33 : vector<128xf32> to vector<1x128xf32>
      %56 = vector.broadcast %55 : vector<1x128xf32> to vector<16x128xf32>
      %57 = arith.addf %54, %56 : vector<16x128xf32>
      %c0_30 = arith.constant 0 : index
      %c0_31 = arith.constant 0 : index
      %c0_32 = arith.constant 0 : index
      %58 = vector.load %arg15[%c0_30, %c0_31, %c0_32] : memref<1x16x128xf32, #tpu.memory_space<vmem>>, vector<1x16x128xf32>
      %59 = vector.shape_cast %58 : vector<1x16x128xf32> to vector<16x128xf32>
      %60 = vector.shape_cast %57 : vector<16x128xf32> to vector<1x16x128xf32>
      tpu.vector_store %arg15[%c0_30, %c0_31, %c0_32], %60 {strides = array<i32>} : memref<1x16x128xf32, #tpu.memory_space<vmem>>, vector<1x16x128xf32>,
    } else {
    }
    return
  }
  func.func @transform_0(%arg0: i32, %arg1: i32) -> (i32, i32, i32) {
    %c0_i32 = arith.constant 0 : i32
    %c0_i32_0 = arith.constant 0 : i32
    %c0_i32_1 = arith.constant 0 : i32
    return %arg0, %c0_i32, %c0_i32_0 : i32, i32, i32
  }
  func.func @transform_1(%arg0: i32, %arg1: i32) -> (i32, i32) {
    %c0_i32 = arith.constant 0 : i32
    %c0_i32_0 = arith.constant 0 : i32
    %c0_i32_1 = arith.constant 0 : i32
    return %c0_i32, %c0_i32_0 : i32, i32
  }
  func.func @transform_2(%arg0: i32, %arg1: i32) -> (i32, i32) {
    %c0_i32 = arith.constant 0 : i32
    %c0_i32_0 = arith.constant 0 : i32
    %c0_i32_1 = arith.constant 0 : i32
    return %c0_i32, %c0_i32_0 : i32, i32
  }
  func.func @transform_3(%arg0: i32, %arg1: i32) -> (i32, i32, i32) {
    %c0_i32 = arith.constant 0 : i32
    %c0_i32_0 = arith.constant 0 : i32
    %c0_i32_1 = arith.constant 0 : i32
    %c0_i32_2 = arith.constant 0 : i32
    return %c0_i32, %c0_i32_0, %c0_i32_1 : i32, i32, i32
  }
  func.func @transform_4(%arg0: i32, %arg1: i32) -> (i32, i32) {
    %c0_i32 = arith.constant 0 : i32
    %c0_i32_0 = arith.constant 0 : i32
    %c0_i32_1 = arith.constant 0 : i32
    return %c0_i32, %c0_i32_0 : i32, i32
  }
  func.func @transform_5(%arg0: i32, %arg1: i32) -> (i32, i32) {
    %c0_i32 = arith.constant 0 : i32
    %c0_i32_0 = arith.constant 0 : i32
    %c0_i32_1 = arith.constant 0 : i32
    return %c0_i32, %c0_i32_0 : i32, i32
  }
  func.func @transform_6(%arg0: i32, %arg1: i32) -> (i32, i32) {
    %c0_i32 = arith.constant 0 : i32
    %c0_i32_0 = arith.constant 0 : i32
    %c0_i32_1 = arith.constant 0 : i32
    return %c0_i32, %c0_i32_0 : i32, i32
  }
  func.func @transform_7(%arg0: i32, %arg1: i32) -> (i32, i32) {
    %c0_i32 = arith.constant 0 : i32
    %c0_i32_0 = arith.constant 0 : i32
    return %c0_i32, %arg1 : i32, i32
  }
  func.func @transform_8(%arg0: i32, %arg1: i32) -> (i32, i32) {
    %c0_i32 = arith.constant 0 : i32
    %c0_i32_0 = arith.constant 0 : i32
    return %c0_i32, %arg1 : i32, i32
  }
  func.func @transform_9(%arg0: i32, %arg1: i32) -> (i32, i32) {
    %c0_i32 = arith.constant 0 : i32
    %c0_i32_0 = arith.constant 0 : i32
    return %arg1, %c0_i32 : i32, i32
  }
  func.func @transform_10(%arg0: i32, %arg1: i32) -> (i32, i32) {
    %c0_i32 = arith.constant 0 : i32
    %c0_i32_0 = arith.constant 0 : i32
    %c0_i32_1 = arith.constant 0 : i32
    return %c0_i32, %c0_i32_0 : i32, i32
  }
  func.func @transform_11(%arg0: i32, %arg1: i32) -> (i32, i32) {
    %c0_i32 = arith.constant 0 : i32
    %c0_i32_0 = arith.constant 0 : i32
    %c0_i32_1 = arith.constant 0 : i32
    return %c0_i32, %c0_i32_0 : i32, i32
  }
  func.func @transform_12(%arg0: i32, %arg1: i32) -> (i32, i32) {
    %c0_i32 = arith.constant 0 : i32
    %c0_i32_0 = arith.constant 0 : i32
    %c0_i32_1 = arith.constant 0 : i32
    return %c0_i32, %c0_i32_0 : i32, i32
  }
  func.func @transform_13(%arg0: i32, %arg1: i32) -> (i32, i32, i32) {
    %c0_i32 = arith.constant 0 : i32
    %c0_i32_0 = arith.constant 0 : i32
    %c0_i32_1 = arith.constant 0 : i32
    return %arg0, %c0_i32, %c0_i32_0 : i32, i32, i32
  }
}

</mosaic_0001>

<llo_original>
// kernel: tpu_custom_call.1
$region0: #{tpu_custom_call.1}
  #allocation0 [shape = 'u32[]', space=smem, size = 0x4, offset = 0x4, fixed_abs, tag = 'smem constant byte address 0x4 - core index']
  #allocation1 [shape = 'u32[144,128]{1,0:T(1,128)}', space=vmem, size = 0x12000, scoped, tag = 'internal scratch']
  #allocation2 [shape = 'bf16[4,16,32]{2,1,0:T(16,128)(2,1)}', space=vmem, size = 0x4000, scoped, tag = 'scratch operand']
  #allocation3 [shape = 'bf16[4,16,32]{2,1,0:T(16,128)(2,1)}', space=vmem, size = 0x4000, scoped, tag = 'scratch operand']
  #allocation4 [shape = 'bf16[4,16,32]{2,1,0:T(16,128)(2,1)}', space=vmem, size = 0x4000, scoped, tag = 'scratch operand']
  #allocation5 [shape = 'f32[16,128]{1,0:T(8,128)}', space=vmem, size = 0x2000, scoped, tag = 'scratch operand']
  #allocation6 [shape = 'bf16[16,128]{1,0:T(16,128)(2,1)}', space=vmem, size = 0x1000, scoped, tag = 'scratch operand']
  #allocation7 [shape = 'f32[16,128]{1,0:T(8,128)}', space=vmem, size = 0x2000, scoped, tag = 'scratch operand']
  %s0 = inlined_call_operand.hbm [shape: f32[2,16,128], index: 0, kind: input, shape index: {}]
  %s1 = inlined_call_operand.hbm [shape: bf16[128,384], index: 1, kind: input, shape index: {}]
  %s2 = inlined_call_operand.vmem [shape: f32[1,384], index: 2, kind: input, shape index: {}]
  %s3 = inlined_call_operand.hbm [shape: bf16[4,32,128], index: 3, kind: input, shape index: {}]
  %s4 = inlined_call_operand.vmem [shape: f32[1,128], index: 4, kind: input, shape index: {}]
  %s5 = inlined_call_operand.vmem [shape: f32[1,128], index: 5, kind: input, shape index: {}]
  %s6 = inlined_call_operand.vmem [shape: f32[1,128], index: 6, kind: input, shape index: {}]
  %s7 = inlined_call_operand.hbm [shape: bf16[128,512], index: 7, kind: input, shape index: {}]
  %s8 = inlined_call_operand.vmem [shape: f32[1,512], index: 8, kind: input, shape index: {}]
  %s9 = inlined_call_operand.hbm [shape: bf16[512,128], index: 9, kind: input, shape index: {}]
  %s10 = inlined_call_operand.vmem [shape: f32[1,128], index: 10, kind: input, shape index: {}]
  %s11 = inlined_call_operand.vmem [shape: f32[1,128], index: 11, kind: input, shape index: {}]
  %s12 = inlined_call_operand.vmem [shape: f32[1,128], index: 12, kind: input, shape index: {}]
  %s13 = inlined_call_operand.hbm [shape: f32[2,16,128], index: 13, kind: output, shape index: {}]
  %s14 = sld [smem:[#allocation0]]
  $region113: #{tpu_custom_call.1} parent=0
    _
  %s16 = ssub.s32 1, %s14
  %s17 = scalar_select 0, %s16, %s14
  $region1: #{tpu_custom_call.1} parent=0
    #allocation8 [shape = 'u8[16384]{0}', space=vmem, size = 0x4000, scoped, tag = 'input window, operand 0']
    #allocation9 [shape = 's32[2]{0}', space=sflag, size = 0x8, scoped, tag = 'scoped memory for tpu_custom_call.1']
    #allocation10 [shape = 's32[2]{0}', space=sflag, size = 0x8, scoped, tag = 'scoped memory for tpu_custom_call.1']
    #allocation11 [shape = 'u8[98304]{0}', space=vmem, size = 0x18000, scoped, tag = 'input window, operand 1, single buffered']
    #allocation12 [shape = 's32[1]{0}', space=sflag, size = 0x4, scoped, tag = 'scoped memory for tpu_custom_call.1']
    #allocation13 [shape = 'u8[32768]{0}', space=vmem, size = 0x8000, scoped, tag = 'input window, operand 3, single buffered']
    #allocation14 [shape = 'u8[131072]{0}', space=vmem, size = 0x20000, scoped, tag = 'input window, operand 7']
    #allocation15 [shape = 's32[2]{0}', space=sflag, size = 0x8, scoped, tag = 'scoped memory for tpu_custom_call.1']
    #allocation16 [shape = 'u8[131072]{0}', space=vmem, size = 0x20000, scoped, tag = 'input window, operand 9']
    #allocation17 [shape = 'u8[16384]{0}', space=vmem, size = 0x4000, scoped, tag = 'output window, operand 0']
    %18 = vsyncpa [#allocation9], 0
    %s19 = scalar_lea.sflag [#allocation9], 1
    %20 = vsyncpa %s19, 0
    %21 = vsyncpa [#allocation12], 0
    %22 = vsyncpa [#allocation15], 0
    %s23 = scalar_lea.sflag [#allocation15], 1
    %24 = vsyncpa %s23, 0
    %25 = vsyncpa [#allocation10], 0
    %s26 = scalar_lea.sflag [#allocation10], 1
    %27 = vsyncpa %s26, 0
    loop: start=0, step=1, limit=6
    $region2: #{tpu_custom_call.1} parent=1 // loop_pre_header
      _
    $region3: #{tpu_custom_call.1} parent=1 // loop_header
      %s29 = sphi 0, %s33
      %p30 = scmp.ge.s32.totalorder %s29, 6
      %s36 = sphi 0, %s48
      %s37 = sphi 0, %s44
      %s38 = sphi 0, %s36
      %s39 = sphi 0, %s37
      %s40 = sphi 0, %s38
      %s41 = sphi 0, %s39
      %s51 = sphi 0, %s53
      %s54 = sphi 0, %s51
      %s55 = sphi 0, %s54
      %s71 = sphi 0, %s55
      %s75 = sphi 0, %s75
      %s77 = sphi 0, %s75
      %s78 = sphi 0, %s77
      %s92 = sphi 0, %s78
      %s96 = sphi 0, %s96
      %s98 = sphi 0, %s96
      %s99 = sphi 0, %s98
      %s113 = sphi 0, %s99
      %s117 = sphi 0, %s117
      %s119 = sphi 0, %s117
      %s120 = sphi 0, %s119
      %s134 = sphi 0, %s120
      %s138 = sphi 0, %s138
      %s140 = sphi 0, %s138
      %s141 = sphi 0, %s140
      %s155 = sphi 0, %s141
      %s159 = sphi 0, %s159
      %s161 = sphi 0, %s159
      %s162 = sphi 0, %s161
      %s176 = sphi 0, %s162
      %s180 = sphi 0, %s180
      %s182 = sphi 0, %s180
      %s183 = sphi 0, %s182
      %s197 = sphi 0, %s183
      %s203 = sphi 0, %s205
      %s206 = sphi 0, %s203
      %s207 = sphi 0, %s206
      %s223 = sphi 0, %s207
      %s229 = sphi 0, %s231
      %s232 = sphi 0, %s229
      %s233 = sphi 0, %s232
      %s249 = sphi 0, %s233
      %s255 = sphi 0, %s257
      %s258 = sphi 0, %s255
      %s259 = sphi 0, %s258
      %s275 = sphi 0, %s259
      %s279 = sphi 0, %s279
      %s281 = sphi 0, %s279
      %s282 = sphi 0, %s281
      %s296 = sphi 0, %s282
      %s300 = sphi 0, %s300
      %s302 = sphi 0, %s300
      %s303 = sphi 0, %s302
      %s317 = sphi 0, %s303
      %s321 = sphi 0, %s321
      %s323 = sphi 0, %s321
      %s324 = sphi 0, %s323
      %s338 = sphi 0, %s324
      %s344 = sphi 0, %s346
      %s347 = sphi 0, %s344
      %s348 = sphi 0, %s347
      %s364 = sphi 0, %s348
    $region4: #{tpu_custom_call.1} parent=1 // loop_header_branch
      %32 = sbr.rel (%p30) target = $region8
    $region5: #{tpu_custom_call.1} parent=1 // loop_body
      %s34 = ssub.s32 %s29, 1
      %s35 = ssub.s32 %s29, 2
      %s42 = sadd.s32 1, %s37
      %p43 = scmp.ge.s32.totalorder %s42, 2
      %s44 = scalar_select %p43, 0, %s42
      %s45 = sadd.s32 1, %s36
      %s46 = scalar_select %p43, %s45, %s36
      %p47 = scmp.ge.s32.totalorder %s46, 2
      %s48 = scalar_select %p47, 0, %s46
      %s49 = ssub.s32 %s36, %s48
      %p50 = scmp.eq.s32.totalorder %s49, 0
      %s52 = sadd.s32 %s51, 1
      %s53 = scalar_select %p50, %s51, %s52
      %p56 = pneg %p50
      %p57 = scmp.eq.s32.totalorder %s29, 3
      %p58 = por %p56, %p57
      %p59 = scmp.ne.s32.totalorder %s51, %s54
      %p60 = scmp.eq.s32.totalorder %s29, 0
      %p61 = por %p59, %p60
      %p62 = scmp.ne.s32.totalorder %s51, %s54
      %p63 = scmp.eq.s32.totalorder %s34, 3
      %p64 = por %p62, %p63
      %p65 = scmp.ne.s32.totalorder %s54, %s55
      %p66 = scmp.eq.s32.totalorder %s34, 0
      %p67 = por %p65, %p66
      %p68 = scmp.ne.s32.totalorder %s54, %s55
      %p69 = scmp.eq.s32.totalorder %s35, 3
      %p70 = por %p68, %p69
      %p72 = scmp.ne.s32.totalorder %s55, %s71
      %p73 = scmp.eq.s32.totalorder %s35, 0
      %p74 = por %p72, %p73
      %s76 = sadd.s32 %s75, 1
      %p79 = scmp.eq.s32.totalorder %s29, 3
      %p80 = scmp.ne.s32.totalorder %s75, %s77
      %p81 = scmp.eq.s32.totalorder %s29, 0
      %p82 = por %p80, %p81
      %p83 = scmp.ne.s32.totalorder %s75, %s77
      %p84 = scmp.eq.s32.totalorder %s34, 3
      %p85 = por %p83, %p84
      %p86 = scmp.ne.s32.totalorder %s77, %s78
      %p87 = scmp.eq.s32.totalorder %s34, 0
      %p88 = por %p86, %p87
      %p89 = scmp.ne.s32.totalorder %s77, %s78
      %p90 = scmp.eq.s32.totalorder %s35, 3
      %p91 = por %p89, %p90
      %p93 = scmp.ne.s32.totalorder %s78, %s92
      %p94 = scmp.eq.s32.totalorder %s35, 0
      %p95 = por %p93, %p94
      %s97 = sadd.s32 %s96, 1
      %p100 = scmp.eq.s32.totalorder %s29, 3
      %p101 = scmp.ne.s32.totalorder %s96, %s98
      %p102 = scmp.eq.s32.totalorder %s29, 0
      %p103 = por %p101, %p102
      %p104 = scmp.ne.s32.totalorder %s96, %s98
      %p105 = scmp.eq.s32.totalorder %s34, 3
      %p106 = por %p104, %p105
      %p107 = scmp.ne.s32.totalorder %s98, %s99
      %p108 = scmp.eq.s32.totalorder %s34, 0
      %p109 = por %p107, %p108
      %p110 = scmp.ne.s32.totalorder %s98, %s99
      %p111 = scmp.eq.s32.totalorder %s35, 3
      %p112 = por %p110, %p111
      %p114 = scmp.ne.s32.totalorder %s99, %s113
      %p115 = scmp.eq.s32.totalorder %s35, 0
      %p116 = por %p114, %p115
      %s118 = sadd.s32 %s117, 1
      %p121 = scmp.eq.s32.totalorder %s29, 3
      %p122 = scmp.ne.s32.totalorder %s117, %s119
      %p123 = scmp.eq.s32.totalorder %s29, 0
      %p124 = por %p122, %p123
      %p125 = scmp.ne.s32.totalorder %s117, %s119
      %p126 = scmp.eq.s32.totalorder %s34, 3
      %p127 = por %p125, %p126
      %p128 = scmp.ne.s32.totalorder %s119, %s120
      %p129 = scmp.eq.s32.totalorder %s34, 0
      %p130 = por %p128, %p129
      %p131 = scmp.ne.s32.totalorder %s119, %s120
      %p132 = scmp.eq.s32.totalorder %s35, 3
      %p133 = por %p131, %p132
      %p135 = scmp.ne.s32.totalorder %s120, %s134
      %p136 = scmp.eq.s32.totalorder %s35, 0
      %p137 = por %p135, %p136
      %s139 = sadd.s32 %s138, 1
      %p142 = scmp.eq.s32.totalorder %s29, 3
      %p143 = scmp.ne.s32.totalorder %s138, %s140
      %p144 = scmp.eq.s32.totalorder %s29, 0
      %p145 = por %p143, %p144
      %p146 = scmp.ne.s32.totalorder %s138, %s140
      %p147 = scmp.eq.s32.totalorder %s34, 3
      %p148 = por %p146, %p147
      %p149 = scmp.ne.s32.totalorder %s140, %s141
      %p150 = scmp.eq.s32.totalorder %s34, 0
      %p151 = por %p149, %p150
      %p152 = scmp.ne.s32.totalorder %s140, %s141
      %p153 = scmp.eq.s32.totalorder %s35, 3
      %p154 = por %p152, %p153
      %p156 = scmp.ne.s32.totalorder %s141, %s155
      %p157 = scmp.eq.s32.totalorder %s35, 0
      %p158 = por %p156, %p157
      %s160 = sadd.s32 %s159, 1
      %p163 = scmp.eq.s32.totalorder %s29, 3
      %p164 = scmp.ne.s32.totalorder %s159, %s161
      %p165 = scmp.eq.s32.totalorder %s29, 0
      %p166 = por %p164, %p165
      %p167 = scmp.ne.s32.totalorder %s159, %s161
      %p168 = scmp.eq.s32.totalorder %s34, 3
      %p169 = por %p167, %p168
      %p170 = scmp.ne.s32.totalorder %s161, %s162
      %p171 = scmp.eq.s32.totalorder %s34, 0
      %p172 = por %p170, %p171
      %p173 = scmp.ne.s32.totalorder %s161, %s162
      %p174 = scmp.eq.s32.totalorder %s35, 3
      %p175 = por %p173, %p174
      %p177 = scmp.ne.s32.totalorder %s162, %s176
      %p178 = scmp.eq.s32.totalorder %s35, 0
      %p179 = por %p177, %p178
      %s181 = sadd.s32 %s180, 1
      %p184 = scmp.eq.s32.totalorder %s29, 3
      %p185 = scmp.ne.s32.totalorder %s180, %s182
      %p186 = scmp.eq.s32.totalorder %s29, 0
      %p187 = por %p185, %p186
      %p188 = scmp.ne.s32.totalorder %s180, %s182
      %p189 = scmp.eq.s32.totalorder %s34, 3
      %p190 = por %p188, %p189
      %p191 = scmp.ne.s32.totalorder %s182, %s183
      %p192 = scmp.eq.s32.totalorder %s34, 0
      %p193 = por %p191, %p192
      %p194 = scmp.ne.s32.totalorder %s182, %s183
      %p195 = scmp.eq.s32.totalorder %s35, 3
      %p196 = por %p194, %p195
      %p198 = scmp.ne.s32.totalorder %s183, %s197
      %p199 = scmp.eq.s32.totalorder %s35, 0
      %p200 = por %p198, %p199
      %s201 = ssub.s32 %s37, %s44
      %p202 = scmp.eq.s32.totalorder %s201, 0
      %s204 = sadd.s32 %s203, 1
      %s205 = scalar_select %p202, %s203, %s204
      %p208 = pneg %p202
      %p209 = scmp.eq.s32.totalorder %s29, 3
      %p210 = por %p208, %p209
      %p211 = scmp.ne.s32.totalorder %s203, %s206
      %p212 = scmp.eq.s32.totalorder %s29, 0
      %p213 = por %p211, %p212
      %p214 = scmp.ne.s32.totalorder %s203, %s206
      %p215 = scmp.eq.s32.totalorder %s34, 3
      %p216 = por %p214, %p215
      %p217 = scmp.ne.s32.totalorder %s206, %s207
      %p218 = scmp.eq.s32.totalorder %s34, 0
      %p219 = por %p217, %p218
      %p220 = scmp.ne.s32.totalorder %s206, %s207
      %p221 = scmp.eq.s32.totalorder %s35, 3
      %p222 = por %p220, %p221
      %p224 = scmp.ne.s32.totalorder %s207, %s223
      %p225 = scmp.eq.s32.totalorder %s35, 0
      %p226 = por %p224, %p225
      %s227 = ssub.s32 %s37, %s44
      %p228 = scmp.eq.s32.totalorder %s227, 0
      %s230 = sadd.s32 %s229, 1
      %s231 = scalar_select %p228, %s229, %s230
      %p234 = pneg %p228
      %p235 = scmp.eq.s32.totalorder %s29, 3
      %p236 = por %p234, %p235
      %p237 = scmp.ne.s32.totalorder %s229, %s232
      %p238 = scmp.eq.s32.totalorder %s29, 0
      %p239 = por %p237, %p238
      %p240 = scmp.ne.s32.totalorder %s229, %s232
      %p241 = scmp.eq.s32.totalorder %s34, 3
      %p242 = por %p240, %p241
      %p243 = scmp.ne.s32.totalorder %s232, %s233
      %p244 = scmp.eq.s32.totalorder %s34, 0
      %p245 = por %p243, %p244
      %p246 = scmp.ne.s32.totalorder %s232, %s233
      %p247 = scmp.eq.s32.totalorder %s35, 3
      %p248 = por %p246, %p247
      %p250 = scmp.ne.s32.totalorder %s233, %s249
      %p251 = scmp.eq.s32.totalorder %s35, 0
      %p252 = por %p250, %p251
      %s253 = ssub.s32 %s37, %s44
      %p254 = scmp.eq.s32.totalorder %s253, 0
      %s256 = sadd.s32 %s255, 1
      %s257 = scalar_select %p254, %s255, %s256
      %p260 = pneg %p254
      %p261 = scmp.eq.s32.totalorder %s29, 3
      %p262 = por %p260, %p261
      %p263 = scmp.ne.s32.totalorder %s255, %s258
      %p264 = scmp.eq.s32.totalorder %s29, 0
      %p265 = por %p263, %p264
      %p266 = scmp.ne.s32.totalorder %s255, %s258
      %p267 = scmp.eq.s32.totalorder %s34, 3
      %p268 = por %p266, %p267
      %p269 = scmp.ne.s32.totalorder %s258, %s259
      %p270 = scmp.eq.s32.totalorder %s34, 0
      %p271 = por %p269, %p270
      %p272 = scmp.ne.s32.totalorder %s258, %s259
      %p273 = scmp.eq.s32.totalorder %s35, 3
      %p274 = por %p272, %p273
      %p276 = scmp.ne.s32.totalorder %s259, %s275
      %p277 = scmp.eq.s32.totalorder %s35, 0
      %p278 = por %p276, %p277
      %s280 = sadd.s32 %s279, 1
      %p283 = scmp.eq.s32.totalorder %s29, 3
      %p284 = scmp.ne.s32.totalorder %s279, %s281
      %p285 = scmp.eq.s32.totalorder %s29, 0
      %p286 = por %p284, %p285
      %p287 = scmp.ne.s32.totalorder %s279, %s281
      %p288 = scmp.eq.s32.totalorder %s34, 3
      %p289 = por %p287, %p288
      %p290 = scmp.ne.s32.totalorder %s281, %s282
      %p291 = scmp.eq.s32.totalorder %s34, 0
      %p292 = por %p290, %p291
      %p293 = scmp.ne.s32.totalorder %s281, %s282
      %p294 = scmp.eq.s32.totalorder %s35, 3
      %p295 = por %p293, %p294
      %p297 = scmp.ne.s32.totalorder %s282, %s296
      %p298 = scmp.eq.s32.totalorder %s35, 0
      %p299 = por %p297, %p298
      %s301 = sadd.s32 %s300, 1
      %p304 = scmp.eq.s32.totalorder %s29, 3
      %p305 = scmp.ne.s32.totalorder %s300, %s302
      %p306 = scmp.eq.s32.totalorder %s29, 0
      %p307 = por %p305, %p306
      %p308 = scmp.ne.s32.totalorder %s300, %s302
      %p309 = scmp.eq.s32.totalorder %s34, 3
      %p310 = por %p308, %p309
      %p311 = scmp.ne.s32.totalorder %s302, %s303
      %p312 = scmp.eq.s32.totalorder %s34, 0
      %p313 = por %p311, %p312
      %p314 = scmp.ne.s32.totalorder %s302, %s303
      %p315 = scmp.eq.s32.totalorder %s35, 3
      %p316 = por %p314, %p315
      %p318 = scmp.ne.s32.totalorder %s303, %s317
      %p319 = scmp.eq.s32.totalorder %s35, 0
      %p320 = por %p318, %p319
      %s322 = sadd.s32 %s321, 1
      %p325 = scmp.eq.s32.totalorder %s29, 3
      %p326 = scmp.ne.s32.totalorder %s321, %s323
      %p327 = scmp.eq.s32.totalorder %s29, 0
      %p328 = por %p326, %p327
      %p329 = scmp.ne.s32.totalorder %s321, %s323
      %p330 = scmp.eq.s32.totalorder %s34, 3
      %p331 = por %p329, %p330
      %p332 = scmp.ne.s32.totalorder %s323, %s324
      %p333 = scmp.eq.s32.totalorder %s34, 0
      %p334 = por %p332, %p333
      %p335 = scmp.ne.s32.totalorder %s323, %s324
      %p336 = scmp.eq.s32.totalorder %s35, 3
      %p337 = por %p335, %p336
      %p339 = scmp.ne.s32.totalorder %s324, %s338
      %p340 = scmp.eq.s32.totalorder %s35, 0
      %p341 = por %p339, %p340
      %s342 = ssub.s32 %s36, %s48
      %p343 = scmp.eq.s32.totalorder %s342, 0
      %s345 = sadd.s32 %s344, 1
      %s346 = scalar_select %p343, %s344, %s345
      %p349 = pneg %p343
      %p350 = scmp.eq.s32.totalorder %s29, 3
      %p351 = por %p349, %p350
      %p352 = scmp.ne.s32.totalorder %s344, %s347
      %p353 = scmp.eq.s32.totalorder %s29, 0
      %p354 = por %p352, %p353
      %p355 = scmp.ne.s32.totalorder %s344, %s347
      %p356 = scmp.eq.s32.totalorder %s34, 3
      %p357 = por %p355, %p356
      %p358 = scmp.ne.s32.totalorder %s347, %s348
      %p359 = scmp.eq.s32.totalorder %s34, 0
      %p360 = por %p358, %p359
      %p361 = scmp.ne.s32.totalorder %s347, %s348
      %p362 = scmp.eq.s32.totalorder %s35, 3
      %p363 = por %p361, %p362
      %p365 = scmp.ne.s32.totalorder %s348, %s364
      %p366 = scmp.eq.s32.totalorder %s35, 0
      %p367 = por %p365, %p366
      %p368 = scmp.le.s32.totalorder 1, %s29
      %p369 = scmp.lt.s32.totalorder %s29, 5
      %p370 = pnand %p368, %p369
      %p371 = pneg %p370
      // Predicated region
      $region9: #{tpu_custom_call.1} parent=5 // pred_check
        _
      $region10: #{tpu_custom_call.1} parent=5 // pred_check_branch
        %373 = sbr.rel (%p370) target = $region12
      $region11: #{tpu_custom_call.1} parent=5 // pred_region
        %s374 = ssub.s32 %s29, 1
        // Predicated region
        $region13: #{tpu_custom_call.1} parent=11 // pred_check
          %p375 = pneg %p88
        $region14: #{tpu_custom_call.1} parent=11 // pred_check_branch
          %377 = sbr.rel (%p375) target = $region16
        $region15: #{tpu_custom_call.1} parent=11 // pred_region
          %s379 = ssub.s32 3072, 3072
          %380 = vsyncadd [#allocation12], %s379
          %s381 = sshll.u32 [#allocation11], 4
          %s382 = int_to_ptr.vmem [resolvable:$true] %s381
          %387 = dma.hbm_to_vmem [thread:$0]  %s1, 3072, %s382, [#allocation12], 192, 192, 12
        $region16: #{tpu_custom_call.1} parent=11 // pred_fallthru
          _
        // Predicated region
        $region17: #{tpu_custom_call.1} parent=11 // pred_check
          %p388 = pneg %p109
        $region18: #{tpu_custom_call.1} parent=11 // pred_check_branch
          %390 = sbr.rel (%p388) target = $region20
        $region19: #{tpu_custom_call.1} parent=11 // pred_region
          _
        $region20: #{tpu_custom_call.1} parent=11 // pred_fallthru
          _
        // Predicated region
        $region21: #{tpu_custom_call.1} parent=11 // pred_check
          %p391 = pneg %p130
        $region22: #{tpu_custom_call.1} parent=11 // pred_check_branch
          %393 = sbr.rel (%p391) target = $region24
        $region23: #{tpu_custom_call.1} parent=11 // pred_region
          %s395 = ssub.s32 1024, 1024
          %396 = vsyncadd [#allocation12], %s395
          %s397 = sshll.u32 [#allocation13], 4
          %s398 = int_to_ptr.vmem [resolvable:$true] %s397
          %403 = dma.hbm_to_vmem [thread:$0]  %s3, 1024, %s398, [#allocation12], 64, 64, 4
        $region24: #{tpu_custom_call.1} parent=11 // pred_fallthru
          _
        // Predicated region
        $region25: #{tpu_custom_call.1} parent=11 // pred_check
          %p404 = pneg %p151
        $region26: #{tpu_custom_call.1} parent=11 // pred_check_branch
          %406 = sbr.rel (%p404) target = $region28
        $region27: #{tpu_custom_call.1} parent=11 // pred_region
          _
        $region28: #{tpu_custom_call.1} parent=11 // pred_fallthru
          _
        // Predicated region
        $region29: #{tpu_custom_call.1} parent=11 // pred_check
          %p407 = pneg %p172
        $region30: #{tpu_custom_call.1} parent=11 // pred_check_branch
          %409 = sbr.rel (%p407) target = $region32
        $region31: #{tpu_custom_call.1} parent=11 // pred_region
          _
        $region32: #{tpu_custom_call.1} parent=11 // pred_fallthru
          _
        // Predicated region
        $region33: #{tpu_custom_call.1} parent=11 // pred_check
          %p410 = pneg %p193
        $region34: #{tpu_custom_call.1} parent=11 // pred_check_branch
          %412 = sbr.rel (%p410) target = $region36
        $region35: #{tpu_custom_call.1} parent=11 // pred_region
          _
        $region36: #{tpu_custom_call.1} parent=11 // pred_fallthru
          _
        // Predicated region
        $region37: #{tpu_custom_call.1} parent=11 // pred_check
          %p413 = pneg %p292
        $region38: #{tpu_custom_call.1} parent=11 // pred_check_branch
          %415 = sbr.rel (%p413) target = $region40
        $region39: #{tpu_custom_call.1} parent=11 // pred_region
          _
        $region40: #{tpu_custom_call.1} parent=11 // pred_fallthru
          _
        // Predicated region
        $region41: #{tpu_custom_call.1} parent=11 // pred_check
          %p416 = pneg %p313
        $region42: #{tpu_custom_call.1} parent=11 // pred_check_branch
          %418 = sbr.rel (%p416) target = $region44
        $region43: #{tpu_custom_call.1} parent=11 // pred_region
          _
        $region44: #{tpu_custom_call.1} parent=11 // pred_fallthru
          _
        // Predicated region
        $region45: #{tpu_custom_call.1} parent=11 // pred_check
          %p419 = pneg %p334
        $region46: #{tpu_custom_call.1} parent=11 // pred_check_branch
          %421 = sbr.rel (%p419) target = $region48
        $region47: #{tpu_custom_call.1} parent=11 // pred_region
          _
        $region48: #{tpu_custom_call.1} parent=11 // pred_fallthru
          _
      $region12: #{tpu_custom_call.1} parent=5 // pred_fallthru
        _
      %p422 = scmp.lt.s32.totalorder %s29, 4
      // Predicated region
      $region49: #{tpu_custom_call.1} parent=5 // pred_check
        %p423 = pneg %p422
      $region50: #{tpu_custom_call.1} parent=5 // pred_check_branch
        %425 = sbr.rel (%p423) target = $region52
      $region51: #{tpu_custom_call.1} parent=5 // pred_region
        // Predicated region
        $region53: #{tpu_custom_call.1} parent=51 // pred_check
          %p426 = pneg %p61
        $region54: #{tpu_custom_call.1} parent=51 // pred_check_branch
          %428 = sbr.rel (%p426) target = $region56
        $region55: #{tpu_custom_call.1} parent=51 // pred_region
          %s429 = sand.u32 %s51, 1
          %s430 = scalar_lea.sflag [#allocation9], %s429
          %s431 = sand.u32 %s51, 1
          %s432 = smul.addr %s431, 16
          %s433 = scalar_lea.vmem [#allocation8], %s432
          %s435 = ssub.s32 256, 256
          %436 = vsyncadd %s430, %s435
          %s437 = smul.addr %s36, 2
          %s438 = smul.addr %s437, 128
          %s439 = scalar_lea.hbm %s0, %s438
          %s440 = sshll.u32 %s433, 4
          %s441 = int_to_ptr.vmem [resolvable:$true] %s440
          %446 = dma.hbm_to_vmem [thread:$0]  %s439, 256, %s441, %s430, 128, 128, 8
        $region56: #{tpu_custom_call.1} parent=51 // pred_fallthru
          _
        // Predicated region
        $region57: #{tpu_custom_call.1} parent=51 // pred_check
          %p447 = pneg %p213
        $region58: #{tpu_custom_call.1} parent=51 // pred_check_branch
          %449 = sbr.rel (%p447) target = $region60
        $region59: #{tpu_custom_call.1} parent=51 // pred_region
          %s450 = sand.u32 %s29, 1
          %s451 = scalar_lea.sflag [#allocation15], %s450
          %s452 = sand.u32 %s203, 1
          %s453 = smul.addr %s452, 128
          %s454 = scalar_lea.vmem [#allocation14], %s453
          %s455 = smul.u32 2, %s37
          %s457 = ssub.s32 2048, 2048
          %458 = vsyncadd %s451, %s457
          %s459 = smul.addr %s455, 64
          %s460 = scalar_lea.hbm %s7, %s459
          %s461 = sshll.u32 %s454, 4
          %s462 = int_to_ptr.vmem [resolvable:$true] %s461
          %467 = dma.hbm_to_vmem [thread:$0]  %s460, 2048, %s462, %s451, 256, 128, 8
        $region60: #{tpu_custom_call.1} parent=51 // pred_fallthru
          _
        // Predicated region
        $region61: #{tpu_custom_call.1} parent=51 // pred_check
          %p468 = pneg %p239
        $region62: #{tpu_custom_call.1} parent=51 // pred_check_branch
          %470 = sbr.rel (%p468) target = $region64
        $region63: #{tpu_custom_call.1} parent=51 // pred_region
          %s471 = smul.u32 2, %s37
          %p472 = scmp.lt.s32.totalorder %s471, 3
          %s473 = scalar_select %p472, %s471, 3
          %s474 = scalar_lea.vmem %s8, %s473
          %s475 = smul.u32 2, %s37
        $region64: #{tpu_custom_call.1} parent=51 // pred_fallthru
          _
        // Predicated region
        $region65: #{tpu_custom_call.1} parent=51 // pred_check
          %p476 = pneg %p265
        $region66: #{tpu_custom_call.1} parent=51 // pred_check_branch
          %478 = sbr.rel (%p476) target = $region68
        $region67: #{tpu_custom_call.1} parent=51 // pred_region
          %s479 = sand.u32 %s29, 1
          %s480 = scalar_lea.sflag [#allocation15], %s479
          %s481 = sand.u32 %s255, 1
          %s482 = smul.addr %s481, 128
          %s483 = scalar_lea.vmem [#allocation16], %s482
          %s484 = smul.u32 32, %s37
          %s486 = ssub.s32 2048, 2048
          %487 = vsyncadd %s480, %s486
          %s488 = smul.addr %s484, 64
          %s489 = scalar_lea.hbm %s9, %s488
          %s490 = sshll.u32 %s483, 4
          %s491 = int_to_ptr.vmem [resolvable:$true] %s490
          %496 = dma.hbm_to_vmem [thread:$0]  %s489, 2048, %s491, %s480, 64, 64, 4
        $region68: #{tpu_custom_call.1} parent=51 // pred_fallthru
          _
      $region52: #{tpu_custom_call.1} parent=5 // pred_fallthru
        _
      %p497 = scmp.le.s32.totalorder 1, %s29
      %p498 = scmp.lt.s32.totalorder %s29, 5
      %p499 = pnand %p497, %p498
      %p500 = pneg %p499
      // Predicated region
      $region69: #{tpu_custom_call.1} parent=5 // pred_check
        _
      $region70: #{tpu_custom_call.1} parent=5 // pred_check_branch
        %502 = sbr.rel (%p499) target = $region72
      $region71: #{tpu_custom_call.1} parent=5 // pred_region
        %s503 = ssub.s32 %s29, 1
        %s504 = sand.u32 %s54, 1
        %s505 = scalar_lea.sflag [#allocation9], %s504
        %s506 = sand.u32 %s54, 1
        %s507 = smul.addr %s506, 16
        %s508 = scalar_lea.vmem [#allocation8], %s507
        // Predicated region
        $region73: #{tpu_custom_call.1} parent=71 // pred_check
          %p509 = pneg %p67
        $region74: #{tpu_custom_call.1} parent=71 // pred_check_branch
          %511 = sbr.rel (%p509) target = $region76
        $region75: #{tpu_custom_call.1} parent=71 // pred_region
          %512 = dma.done %s505, 256
        $region76: #{tpu_custom_call.1} parent=71 // pred_fallthru
          _
        // Predicated region
        $region77: #{tpu_custom_call.1} parent=71 // pred_check
          %p513 = pneg %p88
        $region78: #{tpu_custom_call.1} parent=71 // pred_check_branch
          %515 = sbr.rel (%p513) target = $region80
        $region79: #{tpu_custom_call.1} parent=71 // pred_region
          %516 = dma.done [#allocation12], 3072
        $region80: #{tpu_custom_call.1} parent=71 // pred_fallthru
          _
        // Predicated region
        $region81: #{tpu_custom_call.1} parent=71 // pred_check
          %p517 = pneg %p130
        $region82: #{tpu_custom_call.1} parent=71 // pred_check_branch
          %519 = sbr.rel (%p517) target = $region84
        $region83: #{tpu_custom_call.1} parent=71 // pred_region
          %520 = dma.done [#allocation12], 1024
        $region84: #{tpu_custom_call.1} parent=71 // pred_fallthru
          _
        %s521 = sand.u32 %s34, 1
        %s522 = scalar_lea.sflag [#allocation15], %s521
        %s523 = sand.u32 %s206, 1
        %s524 = smul.addr %s523, 128
        %s525 = scalar_lea.vmem [#allocation14], %s524
        // Predicated region
        $region85: #{tpu_custom_call.1} parent=71 // pred_check
          %p526 = pneg %p219
        $region86: #{tpu_custom_call.1} parent=71 // pred_check_branch
          %528 = sbr.rel (%p526) target = $region88
        $region87: #{tpu_custom_call.1} parent=71 // pred_region
          %529 = dma.done %s522, 2048
        $region88: #{tpu_custom_call.1} parent=71 // pred_fallthru
          _
        %s530 = sand.u32 %s34, 1
        %s531 = scalar_lea.sflag [#allocation15], %s530
        %s532 = sand.u32 %s258, 1
        %s533 = smul.addr %s532, 128
        %s534 = scalar_lea.vmem [#allocation16], %s533
        // Predicated region
        $region89: #{tpu_custom_call.1} parent=71 // pred_check
          %p535 = pneg %p271
        $region90: #{tpu_custom_call.1} parent=71 // pred_check_branch
          %537 = sbr.rel (%p535) target = $region92
        $region91: #{tpu_custom_call.1} parent=71 // pred_region
          %538 = dma.done %s531, 2048
        $region92: #{tpu_custom_call.1} parent=71 // pred_fallthru
          _
        %s539 = sand.u32 %s54, 1
        %s540 = scalar_lea.sflag [#allocation9], %s539
        %s541 = sand.u32 %s54, 1
        %s542 = smul.addr %s541, 16
        %s543 = scalar_lea.vmem [#allocation8], %s542
        %p544 = pneg %p67
        %p545 = pneg %p64
        %p546 = pneg %p88
        %p547 = pneg %p85
        %p548 = pneg %p109
        %p549 = pneg %p106
        %p550 = pneg %p130
        %p551 = pneg %p127
        %p552 = pneg %p151
        %p553 = pneg %p148
        %p554 = pneg %p172
        %p555 = pneg %p169
        %p556 = pneg %p193
        %p557 = pneg %p190
        %s558 = sand.u32 %s34, 1
        %s559 = scalar_lea.sflag [#allocation15], %s558
        %s560 = sand.u32 %s206, 1
        %s561 = smul.addr %s560, 128
        %s562 = scalar_lea.vmem [#allocation14], %s561
        %p563 = pneg %p219
        %p564 = pneg %p216
        %s565 = smul.u32 2, %s39
        %p566 = scmp.lt.s32.totalorder %s565, 3
        %s567 = scalar_select %p566, %s565, 3
        %s568 = scalar_lea.vmem %s8, %s567
        %p569 = pneg %p245
        %p570 = pneg %p242
        %s571 = sand.u32 %s34, 1
        %s572 = scalar_lea.sflag [#allocation15], %s571
        %s573 = sand.u32 %s258, 1
        %s574 = smul.addr %s573, 128
        %s575 = scalar_lea.vmem [#allocation16], %s574
        %p576 = pneg %p271
        %p577 = pneg %p268
        %p578 = pneg %p292
        %p579 = pneg %p289
        %p580 = pneg %p313
        %p581 = pneg %p310
        %p582 = pneg %p334
        %p583 = pneg %p331
        %p584 = pneg %p360
        %p585 = pneg %p357
        %s586 = sand.u32 %s347, 1
        %s587 = scalar_lea.sflag [#allocation10], %s586
        %s588 = sand.u32 %s347, 1
        %s589 = smul.addr %s588, 16
        %s590 = scalar_lea.vmem [#allocation17], %s589
        %s591 = smul.u32 2, %s39
        %s592 = smul.u32 2, %s39
        %p593 = scmp.lt.s32.totalorder %s592, 3
        %s594 = scalar_select %p593, %s592, 3
        %s595 = scalar_lea.vmem %s8, %s594
        %s596 = smul.u32 2, %s39
        %s597 = smul.u32 32, %s39
        %p599 = scmp.eq.s32.totalorder %s39, 0
        // Predicated region
        $region93: #{tpu_custom_call.1} parent=71 // pred_check
          %p600 = pneg %p599
        $region94: #{tpu_custom_call.1} parent=71 // pred_check_branch
          %602 = sbr.rel (%p600) target = $region96
        $region95: #{tpu_custom_call.1} parent=71 // pred_region
          %v603 = vld [vmem:[%s508] sm:$0xff]
          %v604 = vld [vmem:[%s508 + $0x8] sm:$0xff]
          %v605 = vpack.c.bf16 %v604, %v603
          %v606 = vld [vmem:[#allocation11] sm:$0xff]
          %v607 = vld [vmem:[#allocation11 + $0x8] sm:$0xf]
          %v608 = vld [vmem:[#allocation11 + $0xc] sm:$0xff]
          %v609 = vld [vmem:[#allocation11 + $0x14] sm:$0xf]
          %v610 = vld [vmem:[#allocation11 + $0x18] sm:$0xff]
          %v611 = vld [vmem:[#allocation11 + $0x20] sm:$0xf]
          %v612 = vld [vmem:[#allocation11 + $0x24] sm:$0xff]
          %v613 = vld [vmem:[#allocation11 + $0x2c] sm:$0xf]
          %v614 = vld [vmem:[#allocation11 + $0x30] sm:$0xff]
          %v615 = vld [vmem:[#allocation11 + $0x38] sm:$0xf]
          %v616 = vld [vmem:[#allocation11 + $0x3c] sm:$0xff]
          %v617 = vld [vmem:[#allocation11 + $0x44] sm:$0xf]
          %v618 = vld [vmem:[#allocation11 + $0x48] sm:$0xff]
          %v619 = vld [vmem:[#allocation11 + $0x50] sm:$0xf]
          %v620 = vld [vmem:[#allocation11 + $0x54] sm:$0xff]
          %v621 = vld [vmem:[#allocation11 + $0x5c] sm:$0xf]
          %v622 = vld [vmem:[#allocation11 + $0x60] sm:$0xff]
          %v623 = vld [vmem:[#allocation11 + $0x68] sm:$0xf]
          %v624 = vld [vmem:[#allocation11 + $0x6c] sm:$0xff]
          %v625 = vld [vmem:[#allocation11 + $0x74] sm:$0xf]
          %v626 = vld [vmem:[#allocation11 + $0x78] sm:$0xff]
          %v627 = vld [vmem:[#allocation11 + $0x80] sm:$0xf]
          %v628 = vld [vmem:[#allocation11 + $0x84] sm:$0xff]
          %v629 = vld [vmem:[#allocation11 + $0x8c] sm:$0xf]
          %v630 = vld [vmem:[#allocation11 + $0x90] sm:$0xff]
          %v631 = vld [vmem:[#allocation11 + $0x98] sm:$0xf]
          %v632 = vld [vmem:[#allocation11 + $0x9c] sm:$0xff]
          %v633 = vld [vmem:[#allocation11 + $0xa4] sm:$0xf]
          %v634 = vld [vmem:[#allocation11 + $0xa8] sm:$0xff]
          %v635 = vld [vmem:[#allocation11 + $0xb0] sm:$0xf]
          %v636 = vld [vmem:[#allocation11 + $0xb4] sm:$0xff]
          %v637 = vld [vmem:[#allocation11 + $0xbc] sm:$0xf]
          %v638 = vld [vmem:[%s2] sm:$0x7]
          %v640 = vlaneseq
          %v641 = vshrl.u32 %v640, 7
          %v642 = vsub.s32 0, %v641
          %v643 = vrot.slane %v638, %v642
          %v644 = vlaneseq
          %v645 = vshrl.u32 %v644, 7
          %v646 = vsub.s32 1, %v645
          %v647 = vrot.slane %v638, %v646
          %v648 = vlaneseq
          %v649 = vshrl.u32 %v648, 7
          %v650 = vsub.s32 2, %v649
          %v651 = vrot.slane %v638, %v650
          %v687 = vunpack.c.l.b16 %v606
          %v688 = vunpack.c.h.b16 %v606
          %v689 = vunpack.c.l.b16 %v607
          %v690 = vunpack.c.l.b16 %v608
          %v691 = vunpack.c.h.b16 %v608
          %v692 = vunpack.c.l.b16 %v609
          %v693 = vunpack.c.l.b16 %v610
          %v694 = vunpack.c.h.b16 %v610
          %v695 = vunpack.c.l.b16 %v611
          %v696 = vunpack.c.l.b16 %v612
          %v697 = vunpack.c.h.b16 %v612
          %v698 = vunpack.c.l.b16 %v613
          %v699 = vunpack.c.l.b16 %v614
          %v700 = vunpack.c.h.b16 %v614
          %v701 = vunpack.c.l.b16 %v615
          %v702 = vunpack.c.l.b16 %v616
          %v703 = vunpack.c.h.b16 %v616
          %v704 = vunpack.c.l.b16 %v617
          %v705 = vunpack.c.l.b16 %v618
          %v706 = vunpack.c.h.b16 %v618
          %v707 = vunpack.c.l.b16 %v619
          %v708 = vunpack.c.l.b16 %v620
          %v709 = vunpack.c.h.b16 %v620
          %v710 = vunpack.c.l.b16 %v621
          %v711 = vunpack.c.l.b16 %v622
          %v712 = vunpack.c.h.b16 %v622
          %v713 = vunpack.c.l.b16 %v623
          %v714 = vunpack.c.l.b16 %v624
          %v715 = vunpack.c.h.b16 %v624
          %v716 = vunpack.c.l.b16 %v625
          %v717 = vunpack.c.l.b16 %v626
          %v718 = vunpack.c.h.b16 %v626
          %v719 = vunpack.c.l.b16 %v627
          %v720 = vunpack.c.l.b16 %v628
          %v721 = vunpack.c.h.b16 %v628
          %v722 = vunpack.c.l.b16 %v629
          %v723 = vunpack.c.l.b16 %v630
          %v724 = vunpack.c.h.b16 %v630
          %v725 = vunpack.c.l.b16 %v631
          %v726 = vunpack.c.l.b16 %v632
          %v727 = vunpack.c.h.b16 %v632
          %v728 = vunpack.c.l.b16 %v633
          %v729 = vunpack.c.l.b16 %v634
          %v730 = vunpack.c.h.b16 %v634
          %v731 = vunpack.c.l.b16 %v635
          %v732 = vunpack.c.l.b16 %v636
          %v733 = vunpack.c.h.b16 %v636
          %v734 = vunpack.c.l.b16 %v637
          %v735 = vpack.c.b16 %v690, %v687
          %v736 = vpack.c.b16 %v691, %v688
          %v737 = vpack.c.b16 %v692, %v689
          %v738 = vpack.c.b16 %v696, %v693
          %v739 = vpack.c.b16 %v697, %v694
          %v740 = vpack.c.b16 %v698, %v695
          %v741 = vpack.c.b16 %v702, %v699
          %v742 = vpack.c.b16 %v703, %v700
          %v743 = vpack.c.b16 %v704, %v701
          %v744 = vpack.c.b16 %v708, %v705
          %v745 = vpack.c.b16 %v709, %v706
          %v746 = vpack.c.b16 %v710, %v707
          %v747 = vpack.c.b16 %v714, %v711
          %v748 = vpack.c.b16 %v715, %v712
          %v749 = vpack.c.b16 %v716, %v713
          %v750 = vpack.c.b16 %v720, %v717
          %v751 = vpack.c.b16 %v721, %v718
          %v752 = vpack.c.b16 %v722, %v719
          %v753 = vpack.c.b16 %v726, %v723
          %v754 = vpack.c.b16 %v727, %v724
          %v755 = vpack.c.b16 %v728, %v725
          %v756 = vpack.c.b16 %v732, %v729
          %v757 = vpack.c.b16 %v733, %v730
          %v758 = vpack.c.b16 %v734, %v731
          %783 = vmatprep.subr.bf16.mxu0 %v736
          %784 = vmatpush1.bf16.msra.mxu0 %v735
          %785 = vmatprep.subr.bf16.mxu0 %v739
          %786 = vmatpush1.bf16.msra.mxu0 %v738
          %787 = vmatprep.subr.bf16.mxu0 %v742
          %788 = vmatpush1.bf16.msra.mxu0 %v741
          %789 = vmatprep.subr.bf16.mxu0 %v745
          %790 = vmatpush1.bf16.msra.mxu0 %v744
          %791 = vmatprep.subr.bf16.mxu0 %v748
          %792 = vmatpush1.bf16.msra.mxu0 %v747
          %793 = vmatprep.subr.bf16.mxu0 %v751
          %794 = vmatpush1.bf16.msra.mxu0 %v750
          %795 = vmatprep.subr.bf16.mxu0 %v754
          %796 = vmatpush1.bf16.msra.mxu0 %v753
          %797 = vmatprep.subr.bf16.mxu0 %v757
          %798 = vmatpush1.bf16.msra.mxu0 %v756
          %799 = vmatprep.subr.bf16.mxu0 0
          %800 = vmatpush1.bf16.msra.mxu0 0
          %801 = vmatprep.subr.bf16.mxu0 0
          %802 = vmatpush1.bf16.msra.mxu0 0
          %803 = vmatprep.subr.bf16.mxu0 0
          %804 = vmatpush1.bf16.msra.mxu0 0
          %805 = vmatprep.subr.bf16.mxu0 0
          %806 = vmatpush1.bf16.msra.mxu0 0
          %807 = vmatprep.subr.bf16.mxu0 0
          %808 = vmatpush1.bf16.msra.mxu0 0
          %809 = vmatprep.subr.bf16.mxu0 0
          %810 = vmatpush1.bf16.msra.mxu0 0
          %811 = vmatprep.subr.bf16.mxu0 0
          %812 = vmatpush1.bf16.msra.mxu0 0
          %813 = vmatprep.subr.bf16.mxu0 0
          %814 = vmatpush1.bf16.msra.mxu0 0
          %815 = vmatprep.mubr.bf16.mxu0 0
          %816 = vmatmul.mubr.bf16.gmra.mrb[0].mxu0 %v605
          %v817 = vpop.f32.mrb[0].mxu0
          %v818 = vadd.f32 %v643, %v817
          %v819 = vpop.f32.mrb[0].mxu0
          %v820 = vadd.f32 %v647, %v819
          %v821 = vpop.f32.mrb[0].mxu0
          %v822 = vadd.f32 %v643, %v821
          %v823 = vpop.f32.mrb[0].mxu0
          %v824 = vadd.f32 %v647, %v823
          %825 = vdwg.mxu0
          %826 = vmatprep.subr.bf16.mxu0 0
          %827 = vmatpush1.bf16.msra.mxu0 %v737
          %828 = vmatprep.subr.bf16.mxu0 0
          %829 = vmatpush1.bf16.msra.mxu0 %v740
          %830 = vmatprep.subr.bf16.mxu0 0
          %831 = vmatpush1.bf16.msra.mxu0 %v743
          %832 = vmatprep.subr.bf16.mxu0 0
          %833 = vmatpush1.bf16.msra.mxu0 %v746
          %834 = vmatprep.subr.bf16.mxu0 0
          %835 = vmatpush1.bf16.msra.mxu0 %v749
          %836 = vmatprep.subr.bf16.mxu0 0
          %837 = vmatpush1.bf16.msra.mxu0 %v752
          %838 = vmatprep.subr.bf16.mxu0 0
          %839 = vmatpush1.bf16.msra.mxu0 %v755
          %840 = vmatprep.subr.bf16.mxu0 0
          %841 = vmatpush1.bf16.msra.mxu0 %v758
          %842 = vmatprep.subr.bf16.mxu0 0
          %843 = vmatpush1.bf16.msra.mxu0 0
          %844 = vmatprep.subr.bf16.mxu0 0
          %845 = vmatpush1.bf16.msra.mxu0 0
          %846 = vmatprep.subr.bf16.mxu0 0
          %847 = vmatpush1.bf16.msra.mxu0 0
          %848 = vmatprep.subr.bf16.mxu0 0
          %849 = vmatpush1.bf16.msra.mxu0 0
          %850 = vmatprep.subr.bf16.mxu0 0
          %851 = vmatpush1.bf16.msra.mxu0 0
          %852 = vmatprep.subr.bf16.mxu0 0
          %853 = vmatpush1.bf16.msra.mxu0 0
          %854 = vmatprep.subr.bf16.mxu0 0
          %855 = vmatpush1.bf16.msra.mxu0 0
          %856 = vmatprep.subr.bf16.mxu0 0
          %857 = vmatpush1.bf16.msra.mxu0 0
          %858 = vmatprep.mubr.bf16.mxu0 0
          %859 = vmatmul.mubr.bf16.gmra.mrb[0].mxu0 %v605
          %v860 = vpop.f32.mrb[0].mxu0
          %v861 = vadd.f32 %v651, %v860
          %v862 = vpop.f32.mrb[0].mxu0
          %v863 = vpop.f32.mrb[0].mxu0
          %v864 = vadd.f32 %v651, %v863
          %v865 = vpop.f32.mrb[0].mxu0
          %866 = vdwg.mxu0
          %v867 = vpack.c.bf16 %v822, %v818
          %vm868 = vcmask 261120
          %869 = vst.msk [vmem:[#allocation2] sm:$0xff] %vm868, %v867
          %v870 = vpack.c.bf16 %v824, %v820
          %871 = vst.msk [vmem:[#allocation3] sm:$0xff] %vm868, %v870
          %v872 = vpack.c.bf16 %v864, %v861
          %873 = vst.msk [vmem:[#allocation4] sm:$0xff] %vm868, %v872
          %875 = vrot.lane.b32.xlu0 %v867, 96
          %v876 = vpop.permute.xlu0 %875
          %s878 = scalar_lea.vmem [#allocation2], 8
          %879 = vst.msk [vmem:[%s878] sm:$0xff] %vm868, %v876
          %881 = vrot.lane.b32.xlu0 %v870, 96
          %v882 = vpop.permute.xlu0 %881
          %s884 = scalar_lea.vmem [#allocation3], 8
          %885 = vst.msk [vmem:[%s884] sm:$0xff] %vm868, %v882
          %887 = vrot.lane.b32.xlu0 %v872, 96
          %v888 = vpop.permute.xlu0 %887
          %s890 = scalar_lea.vmem [#allocation4], 8
          %891 = vst.msk [vmem:[%s890] sm:$0xff] %vm868, %v888
          %892 = vrot.lane.b32.xlu0 %v867, 64
          %v893 = vpop.permute.xlu0 %892
          %s895 = scalar_lea.vmem [#allocation2], 16
          %896 = vst.msk [vmem:[%s895] sm:$0xff] %vm868, %v893
          %897 = vrot.lane.b32.xlu0 %v870, 64
          %v898 = vpop.permute.xlu0 %897
          %s900 = scalar_lea.vmem [#allocation3], 16
          %901 = vst.msk [vmem:[%s900] sm:$0xff] %vm868, %v898
          %902 = vrot.lane.b32.xlu0 %v872, 64
          %v903 = vpop.permute.xlu0 %902
          %s905 = scalar_lea.vmem [#allocation4], 16
          %906 = vst.msk [vmem:[%s905] sm:$0xff] %vm868, %v903
          %907 = vrot.lane.b32.xlu0 %v867, 32
          %v908 = vpop.permute.xlu0 %907
          %s910 = scalar_lea.vmem [#allocation2], 24
          %911 = vst.msk [vmem:[%s910] sm:$0xff] %vm868, %v908
          %912 = vrot.lane.b32.xlu0 %v870, 32
          %v913 = vpop.permute.xlu0 %912
          %s915 = scalar_lea.vmem [#allocation3], 24
          %916 = vst.msk [vmem:[%s915] sm:$0xff] %vm868, %v913
          %917 = vrot.lane.b32.xlu0 %v872, 32
          %v918 = vpop.permute.xlu0 %917
          %s920 = scalar_lea.vmem [#allocation4], 24
          %921 = vst.msk [vmem:[%s920] sm:$0xff] %vm868, %v918
          %v922 = vld [vmem:[#allocation2] sm:$0xff]
          %v923 = vld [vmem:[#allocation2 + $0x8] sm:$0xff]
          %v924 = vld [vmem:[#allocation2 + $0x10] sm:$0xff]
          %v925 = vld [vmem:[#allocation2 + $0x18] sm:$0xff]
          %v926 = vld [vmem:[#allocation3] sm:$0xff]
          %v927 = vld [vmem:[#allocation3 + $0x8] sm:$0xff]
          %v928 = vld [vmem:[#allocation3 + $0x10] sm:$0xff]
          %v929 = vld [vmem:[#allocation3 + $0x18] sm:$0xff]
          %v930 = vld [vmem:[#allocation4] sm:$0xff]
          %v931 = vld [vmem:[#allocation4 + $0x8] sm:$0xff]
          %v932 = vld [vmem:[#allocation4 + $0x10] sm:$0xff]
          %v933 = vld [vmem:[#allocation4 + $0x18] sm:$0xff]
          %v935 = vsel %vm868, %v922, 0
          %v938 = vsel %vm868, %v926, 0
          %940 = vmatprep.subr.bf16.mxu0 0
          %941 = vmatpush1.bf16.xpose.msra.mxu0 %v938
          %942 = vmatprep.subr.bf16.mxu0 0
          %943 = vmatpush1.bf16.xpose.msra.mxu0 0
          %944 = vmatprep.subr.bf16.mxu0 0
          %945 = vmatpush1.bf16.xpose.msra.mxu0 0
          %946 = vmatprep.subr.bf16.mxu0 0
          %947 = vmatpush1.bf16.xpose.msra.mxu0 0
          %948 = vmatprep.subr.bf16.mxu0 0
          %949 = vmatpush1.bf16.xpose.msra.mxu0 0
          %950 = vmatprep.subr.bf16.mxu0 0
          %951 = vmatpush1.bf16.xpose.msra.mxu0 0
          %952 = vmatprep.subr.bf16.mxu0 0
          %953 = vmatpush1.bf16.xpose.msra.mxu0 0
          %954 = vmatprep.subr.bf16.mxu0 0
          %955 = vmatpush1.bf16.xpose.msra.mxu0 0
          %956 = vmatprep.subr.bf16.mxu0 0
          %957 = vmatpush1.bf16.xpose.msra.mxu0 0
          %958 = vmatprep.subr.bf16.mxu0 0
          %959 = vmatpush1.bf16.xpose.msra.mxu0 0
          %960 = vmatprep.subr.bf16.mxu0 0
          %961 = vmatpush1.bf16.xpose.msra.mxu0 0
          %962 = vmatprep.subr.bf16.mxu0 0
          %963 = vmatpush1.bf16.xpose.msra.mxu0 0
          %964 = vmatprep.subr.bf16.mxu0 0
          %965 = vmatpush1.bf16.xpose.msra.mxu0 0
          %966 = vmatprep.subr.bf16.mxu0 0
          %967 = vmatpush1.bf16.xpose.msra.mxu0 0
          %968 = vmatprep.subr.bf16.mxu0 0
          %969 = vmatpush1.bf16.xpose.msra.mxu0 0
          %970 = vmatprep.subr.bf16.mxu0 0
          %971 = vmatpush1.bf16.xpose.msra.mxu0 0
          %972 = vmatprep.mubr.bf16.mxu0 0
          %973 = vmatmul.mubr.bf16.gmra.mrb[0].mxu0 %v935
          %v974 = vpop.f32.mrb[0].mxu0
          %v975 = vadd.f32 0.0, %v974
          %v976 = vpop.f32.mrb[0].mxu0
          %v977 = vpop.f32.mrb[0].mxu0
          %v978 = vadd.f32 0.0, %v977
          %v979 = vpop.f32.mrb[0].mxu0
          %980 = vdwg.mxu0
          %v982 = vsel %vm868, %v923, 0
          %v985 = vsel %vm868, %v927, 0
          %987 = vmatprep.subr.bf16.mxu0 0
          %988 = vmatpush1.bf16.xpose.msra.mxu0 %v985
          %989 = vmatprep.subr.bf16.mxu0 0
          %990 = vmatpush1.bf16.xpose.msra.mxu0 0
          %991 = vmatprep.subr.bf16.mxu0 0
          %992 = vmatpush1.bf16.xpose.msra.mxu0 0
          %993 = vmatprep.subr.bf16.mxu0 0
          %994 = vmatpush1.bf16.xpose.msra.mxu0 0
          %995 = vmatprep.subr.bf16.mxu0 0
          %996 = vmatpush1.bf16.xpose.msra.mxu0 0
          %997 = vmatprep.subr.bf16.mxu0 0
          %998 = vmatpush1.bf16.xpose.msra.mxu0 0
          %999 = vmatprep.subr.bf16.mxu0 0
          %1000 = vmatpush1.bf16.xpose.msra.mxu0 0
          %1001 = vmatprep.subr.bf16.mxu0 0
          %1002 = vmatpush1.bf16.xpose.msra.mxu0 0
          %1003 = vmatprep.subr.bf16.mxu0 0
          %1004 = vmatpush1.bf16.xpose.msra.mxu0 0
          %1005 = vmatprep.subr.bf16.mxu0 0
          %1006 = vmatpush1.bf16.xpose.msra.mxu0 0
          %1007 = vmatprep.subr.bf16.mxu0 0
          %1008 = vmatpush1.bf16.xpose.msra.mxu0 0
          %1009 = vmatprep.subr.bf16.mxu0 0
          %1010 = vmatpush1.bf16.xpose.msra.mxu0 0
          %1011 = vmatprep.subr.bf16.mxu0 0
          %1012 = vmatpush1.bf16.xpose.msra.mxu0 0
          %1013 = vmatprep.subr.bf16.mxu0 0
          %1014 = vmatpush1.bf16.xpose.msra.mxu0 0
          %1015 = vmatprep.subr.bf16.mxu0 0
          %1016 = vmatpush1.bf16.xpose.msra.mxu0 0
          %1017 = vmatprep.subr.bf16.mxu0 0
          %1018 = vmatpush1.bf16.xpose.msra.mxu0 0
          %1019 = vmatprep.mubr.bf16.mxu0 0
          %1020 = vmatmul.mubr.bf16.gmra.mrb[0].mxu0 %v982
          %v1021 = vpop.f32.mrb[0].mxu0
          %v1022 = vadd.f32 0.0, %v1021
          %v1023 = vpop.f32.mrb[0].mxu0
          %v1024 = vpop.f32.mrb[0].mxu0
          %v1025 = vadd.f32 0.0, %v1024
          %v1026 = vpop.f32.mrb[0].mxu0
          %1027 = vdwg.mxu0
          %v1029 = vsel %vm868, %v924, 0
          %v1032 = vsel %vm868, %v928, 0
          %1034 = vmatprep.subr.bf16.mxu0 0
          %1035 = vmatpush1.bf16.xpose.msra.mxu0 %v1032
          %1036 = vmatprep.subr.bf16.mxu0 0
          %1037 = vmatpush1.bf16.xpose.msra.mxu0 0
          %1038 = vmatprep.subr.bf16.mxu0 0
          %1039 = vmatpush1.bf16.xpose.msra.mxu0 0
          %1040 = vmatprep.subr.bf16.mxu0 0
          %1041 = vmatpush1.bf16.xpose.msra.mxu0 0
          %1042 = vmatprep.subr.bf16.mxu0 0
          %1043 = vmatpush1.bf16.xpose.msra.mxu0 0
          %1044 = vmatprep.subr.bf16.mxu0 0
          %1045 = vmatpush1.bf16.xpose.msra.mxu0 0
          %1046 = vmatprep.subr.bf16.mxu0 0
          %1047 = vmatpush1.bf16.xpose.msra.mxu0 0
          %1048 = vmatprep.subr.bf16.mxu0 0
          %1049 = vmatpush1.bf16.xpose.msra.mxu0 0
          %1050 = vmatprep.subr.bf16.mxu0 0
          %1051 = vmatpush1.bf16.xpose.msra.mxu0 0
          %1052 = vmatprep.subr.bf16.mxu0 0
          %1053 = vmatpush1.bf16.xpose.msra.mxu0 0
          %1054 = vmatprep.subr.bf16.mxu0 0
          %1055 = vmatpush1.bf16.xpose.msra.mxu0 0
          %1056 = vmatprep.subr.bf16.mxu0 0
          %1057 = vmatpush1.bf16.xpose.msra.mxu0 0
          %1058 = vmatprep.subr.bf16.mxu0 0
          %1059 = vmatpush1.bf16.xpose.msra.mxu0 0
          %1060 = vmatprep.subr.bf16.mxu0 0
          %1061 = vmatpush1.bf16.xpose.msra.mxu0 0
          %1062 = vmatprep.subr.bf16.mxu0 0
          %1063 = vmatpush1.bf16.xpose.msra.mxu0 0
          %1064 = vmatprep.subr.bf16.mxu0 0
          %1065 = vmatpush1.bf16.xpose.msra.mxu0 0
          %1066 = vmatprep.mubr.bf16.mxu0 0
          %1067 = vmatmul.mubr.bf16.gmra.mrb[0].mxu0 %v1029
          %v1068 = vpop.f32.mrb[0].mxu0
          %v1069 = vadd.f32 0.0, %v1068
          %v1070 = vpop.f32.mrb[0].mxu0
          %v1071 = vpop.f32.mrb[0].mxu0
          %v1072 = vadd.f32 0.0, %v1071
          %v1073 = vpop.f32.mrb[0].mxu0
          %1074 = vdwg.mxu0
          %v1076 = vsel %vm868, %v925, 0
          %v1079 = vsel %vm868, %v929, 0
          %1081 = vmatprep.subr.bf16.mxu0 0
          %1082 = vmatpush1.bf16.xpose.msra.mxu0 %v1079
          %1083 = vmatprep.subr.bf16.mxu0 0
          %1084 = vmatpush1.bf16.xpose.msra.mxu0 0
          %1085 = vmatprep.subr.bf16.mxu0 0
          %1086 = vmatpush1.bf16.xpose.msra.mxu0 0
          %1087 = vmatprep.subr.bf16.mxu0 0
          %1088 = vmatpush1.bf16.xpose.msra.mxu0 0
          %1089 = vmatprep.subr.bf16.mxu0 0
          %1090 = vmatpush1.bf16.xpose.msra.mxu0 0
          %1091 = vmatprep.subr.bf16.mxu0 0
          %1092 = vmatpush1.bf16.xpose.msra.mxu0 0
          %1093 = vmatprep.subr.bf16.mxu0 0
          %1094 = vmatpush1.bf16.xpose.msra.mxu0 0
          %1095 = vmatprep.subr.bf16.mxu0 0
          %1096 = vmatpush1.bf16.xpose.msra.mxu0 0
          %1097 = vmatprep.subr.bf16.mxu0 0
          %1098 = vmatpush1.bf16.xpose.msra.mxu0 0
          %1099 = vmatprep.subr.bf16.mxu0 0
          %1100 = vmatpush1.bf16.xpose.msra.mxu0 0
          %1101 = vmatprep.subr.bf16.mxu0 0
          %1102 = vmatpush1.bf16.xpose.msra.mxu0 0
          %1103 = vmatprep.subr.bf16.mxu0 0
          %1104 = vmatpush1.bf16.xpose.msra.mxu0 0
          %1105 = vmatprep.subr.bf16.mxu0 0
          %1106 = vmatpush1.bf16.xpose.msra.mxu0 0
          %1107 = vmatprep.subr.bf16.mxu0 0
          %1108 = vmatpush1.bf16.xpose.msra.mxu0 0
          %1109 = vmatprep.subr.bf16.mxu0 0
          %1110 = vmatpush1.bf16.xpose.msra.mxu0 0
          %1111 = vmatprep.subr.bf16.mxu0 0
          %1112 = vmatpush1.bf16.xpose.msra.mxu0 0
          %1113 = vmatprep.mubr.bf16.mxu0 0
          %1114 = vmatmul.mubr.bf16.gmra.mrb[0].mxu0 %v1076
          %v1115 = vpop.f32.mrb[0].mxu0
          %v1116 = vadd.f32 0.0, %v1115
          %v1117 = vpop.f32.mrb[0].mxu0
          %v1118 = vpop.f32.mrb[0].mxu0
          %v1119 = vadd.f32 0.0, %v1118
          %v1120 = vpop.f32.mrb[0].mxu0
          %1121 = vdwg.mxu0
          %v1122 = vmul.f32 %v975, 0.17677669
          %v1123 = vmul.f32 %v978, 0.17677669
          %v1124 = vmul.f32 %v1022, 0.17677669
          %v1125 = vmul.f32 %v1025, 0.17677669
          %v1126 = vmul.f32 %v1069, 0.17677669
          %v1127 = vmul.f32 %v1072, 0.17677669
          %v1128 = vmul.f32 %v1116, 0.17677669
          %v1129 = vmul.f32 %v1119, 0.17677669
          %v1130 = vlaneseq
          %v1131 = vshrl.u32 %v1130, 7
          %v1132 = vadd.s32 %v1131, 8
          %v1133 = vlaneseq
          %v1134 = vand.u32 %v1133, 127
          %vm1135 = vcmp.ge.s32.totalorder %v1131, %v1134
          %vm1136 = vcmp.ge.s32.totalorder %v1132, %v1134
          %v1137 = vsel %vm1135, 1, 0
          %v1138 = vsel %vm1136, 1, 0
          %vm1139 = vcmp.eq.s32.totalorder %v1137, 1
          %vm1140 = vcmp.eq.s32.totalorder %v1138, 1
          %v1141 = vsel %vm1139, %v1122, -1e+30
          %v1142 = vsel %vm1140, %v1123, -1e+30
          %v1143 = vsel %vm1139, %v1124, -1e+30
          %v1144 = vsel %vm1140, %v1125, -1e+30
          %v1145 = vsel %vm1139, %v1126, -1e+30
          %v1146 = vsel %vm1140, %v1127, -1e+30
          %v1147 = vsel %vm1139, %v1128, -1e+30
          %v1148 = vsel %vm1140, %v1129, -1e+30
          %vm1149 = vcmask 130048
          %v1150 = vsel %vm1149, %v1141, -inf
          %1151 = vmax.xlane.f32.xlu0 %v1150
          %v1152 = vpop.xlane.xlu0 %1151
          %v1153 = vsel %vm1149, %v1142, -inf
          %1154 = vmax.xlane.f32.xlu0 %v1153
          %v1155 = vpop.xlane.xlu0 %1154
          %v1156 = vsel %vm1149, %v1143, -inf
          %1157 = vmax.xlane.f32.xlu0 %v1156
          %v1158 = vpop.xlane.xlu0 %1157
          %v1159 = vsel %vm1149, %v1144, -inf
          %1160 = vmax.xlane.f32.xlu0 %v1159
          %v1161 = vpop.xlane.xlu0 %1160
          %v1162 = vsel %vm1149, %v1145, -inf
          %1163 = vmax.xlane.f32.xlu0 %v1162
          %v1164 = vpop.xlane.xlu0 %1163
          %v1165 = vsel %vm1149, %v1146, -inf
          %1166 = vmax.xlane.f32.xlu0 %v1165
          %v1167 = vpop.xlane.xlu0 %1166
          %v1168 = vsel %vm1149, %v1147, -inf
          %1169 = vmax.xlane.f32.xlu0 %v1168
          %v1170 = vpop.xlane.xlu0 %1169
          %v1171 = vsel %vm1149, %v1148, -inf
          %1172 = vmax.xlane.f32.xlu0 %v1171
          %v1173 = vpop.xlane.xlu0 %1172
          %v1174 = vsub.f32 %v1141, %v1152
          %v1175 = vsub.f32 %v1142, %v1155
          %v1176 = vsub.f32 %v1143, %v1158
          %v1177 = vsub.f32 %v1144, %v1161
          %v1178 = vsub.f32 %v1145, %v1164
          %v1179 = vsub.f32 %v1146, %v1167
          %v1180 = vsub.f32 %v1147, %v1170
          %v1181 = vsub.f32 %v1148, %v1173
          %v1182 = vmul.f32 %v1174, 1.442695
          %v1183 = vpow.pop %v1182
          %v1184 = vmul.f32 %v1175, 1.442695
          %v1185 = vpow.pop %v1184
          %v1186 = vmul.f32 %v1176, 1.442695
          %v1187 = vpow.pop %v1186
          %v1188 = vmul.f32 %v1177, 1.442695
          %v1189 = vpow.pop %v1188
          %v1190 = vmul.f32 %v1178, 1.442695
          %v1191 = vpow.pop %v1190
          %v1192 = vmul.f32 %v1179, 1.442695
          %v1193 = vpow.pop %v1192
          %v1194 = vmul.f32 %v1180, 1.442695
          %v1195 = vpow.pop %v1194
          %v1196 = vmul.f32 %v1181, 1.442695
          %v1197 = vpow.pop %v1196
          %v1198 = vsel %vm1149, %v1183, 0.0
          %1199 = vadd.xlane.f32.xlu0 %v1198
          %v1200 = vpop.xlane.xlu0 %1199
          %v1201 = vsel %vm1149, %v1185, 0.0
          %1202 = vadd.xlane.f32.xlu0 %v1201
          %v1203 = vpop.xlane.xlu0 %1202
          %v1204 = vsel %vm1149, %v1187, 0.0
          %1205 = vadd.xlane.f32.xlu0 %v1204
          %v1206 = vpop.xlane.xlu0 %1205
          %v1207 = vsel %vm1149, %v1189, 0.0
          %1208 = vadd.xlane.f32.xlu0 %v1207
          %v1209 = vpop.xlane.xlu0 %1208
          %v1210 = vsel %vm1149, %v1191, 0.0
          %1211 = vadd.xlane.f32.xlu0 %v1210
          %v1212 = vpop.xlane.xlu0 %1211
          %v1213 = vsel %vm1149, %v1193, 0.0
          %1214 = vadd.xlane.f32.xlu0 %v1213
          %v1215 = vpop.xlane.xlu0 %1214
          %v1216 = vsel %vm1149, %v1195, 0.0
          %1217 = vadd.xlane.f32.xlu0 %v1216
          %v1218 = vpop.xlane.xlu0 %1217
          %v1219 = vsel %vm1149, %v1197, 0.0
          %1220 = vadd.xlane.f32.xlu0 %v1219
          %v1221 = vpop.xlane.xlu0 %1220
          %v1222 = vrcp.pop %v1200
          %v1223 = vrcp.pop %v1203
          %v1224 = vrcp.pop %v1206
          %v1225 = vrcp.pop %v1209
          %v1226 = vrcp.pop %v1212
          %v1227 = vrcp.pop %v1215
          %v1228 = vrcp.pop %v1218
          %v1229 = vrcp.pop %v1221
          %v1230 = vmul.f32 %v1183, %v1222
          %v1231 = vmul.f32 %v1185, %v1223
          %v1232 = vmul.f32 %v1187, %v1224
          %v1233 = vmul.f32 %v1189, %v1225
          %v1234 = vmul.f32 %v1191, %v1226
          %v1235 = vmul.f32 %v1193, %v1227
          %v1236 = vmul.f32 %v1195, %v1228
          %v1237 = vmul.f32 %v1197, %v1229
          %v1238 = vpack.c.bf16 %v1231, %v1230
          %v1239 = vpack.c.bf16 %v1233, %v1232
          %v1240 = vpack.c.bf16 %v1235, %v1234
          %v1241 = vpack.c.bf16 %v1237, %v1236
          %v1243 = vsel %vm1149, %v1238, 0
          %1245 = vmatprep.subr.bf16.mxu0 0
          %1246 = vmatpush1.bf16.msra.mxu0 %v930
          %1247 = vmatprep.subr.bf16.mxu0 0
          %1248 = vmatpush1.bf16.msra.mxu0 0
          %1249 = vmatprep.subr.bf16.mxu0 0
          %1250 = vmatpush1.bf16.msra.mxu0 0
          %1251 = vmatprep.subr.bf16.mxu0 0
          %1252 = vmatpush1.bf16.msra.mxu0 0
          %1253 = vmatprep.subr.bf16.mxu0 0
          %1254 = vmatpush1.bf16.msra.mxu0 0
          %1255 = vmatprep.subr.bf16.mxu0 0
          %1256 = vmatpush1.bf16.msra.mxu0 0
          %1257 = vmatprep.subr.bf16.mxu0 0
          %1258 = vmatpush1.bf16.msra.mxu0 0
          %1259 = vmatprep.subr.bf16.mxu0 0
          %1260 = vmatpush1.bf16.msra.mxu0 0
          %1261 = vmatprep.subr.bf16.mxu0 0
          %1262 = vmatpush1.bf16.msra.mxu0 0
          %1263 = vmatprep.subr.bf16.mxu0 0
          %1264 = vmatpush1.bf16.msra.mxu0 0
          %1265 = vmatprep.subr.bf16.mxu0 0
          %1266 = vmatpush1.bf16.msra.mxu0 0
          %1267 = vmatprep.subr.bf16.mxu0 0
          %1268 = vmatpush1.bf16.msra.mxu0 0
          %1269 = vmatprep.subr.bf16.mxu0 0
          %1270 = vmatpush1.bf16.msra.mxu0 0
          %1271 = vmatprep.subr.bf16.mxu0 0
          %1272 = vmatpush1.bf16.msra.mxu0 0
          %1273 = vmatprep.subr.bf16.mxu0 0
          %1274 = vmatpush1.bf16.msra.mxu0 0
          %1275 = vmatprep.subr.bf16.mxu0 0
          %1276 = vmatpush1.bf16.msra.mxu0 0
          %1277 = vmatprep.mubr.bf16.mxu0 0
          %1278 = vmatmul.mubr.bf16.gmra.mrb[0].mxu0 %v1243
          %v1279 = vpop.f32.mrb[0].mxu0
          %v1280 = vadd.f32 0.0, %v1279
          %v1281 = vpop.f32.mrb[0].mxu0
          %v1282 = vpop.f32.mrb[0].mxu0
          %v1283 = vadd.f32 0.0, %v1282
          %v1284 = vpop.f32.mrb[0].mxu0
          %1285 = vdwg.mxu0
          %v1287 = vsel %vm1149, %v1239, 0
          %1289 = vmatprep.subr.bf16.mxu0 0
          %1290 = vmatpush1.bf16.msra.mxu0 %v931
          %1291 = vmatprep.subr.bf16.mxu0 0
          %1292 = vmatpush1.bf16.msra.mxu0 0
          %1293 = vmatprep.subr.bf16.mxu0 0
          %1294 = vmatpush1.bf16.msra.mxu0 0
          %1295 = vmatprep.subr.bf16.mxu0 0
          %1296 = vmatpush1.bf16.msra.mxu0 0
          %1297 = vmatprep.subr.bf16.mxu0 0
          %1298 = vmatpush1.bf16.msra.mxu0 0
          %1299 = vmatprep.subr.bf16.mxu0 0
          %1300 = vmatpush1.bf16.msra.mxu0 0
          %1301 = vmatprep.subr.bf16.mxu0 0
          %1302 = vmatpush1.bf16.msra.mxu0 0
          %1303 = vmatprep.subr.bf16.mxu0 0
          %1304 = vmatpush1.bf16.msra.mxu0 0
          %1305 = vmatprep.subr.bf16.mxu0 0
          %1306 = vmatpush1.bf16.msra.mxu0 0
          %1307 = vmatprep.subr.bf16.mxu0 0
          %1308 = vmatpush1.bf16.msra.mxu0 0
          %1309 = vmatprep.subr.bf16.mxu0 0
          %1310 = vmatpush1.bf16.msra.mxu0 0
          %1311 = vmatprep.subr.bf16.mxu0 0
          %1312 = vmatpush1.bf16.msra.mxu0 0
          %1313 = vmatprep.subr.bf16.mxu0 0
          %1314 = vmatpush1.bf16.msra.mxu0 0
          %1315 = vmatprep.subr.bf16.mxu0 0
          %1316 = vmatpush1.bf16.msra.mxu0 0
          %1317 = vmatprep.subr.bf16.mxu0 0
          %1318 = vmatpush1.bf16.msra.mxu0 0
          %1319 = vmatprep.subr.bf16.mxu0 0
          %1320 = vmatpush1.bf16.msra.mxu0 0
          %1321 = vmatprep.mubr.bf16.mxu0 0
          %1322 = vmatmul.mubr.bf16.gmra.mrb[0].mxu0 %v1287
          %v1323 = vpop.f32.mrb[0].mxu0
          %v1324 = vadd.f32 0.0, %v1323
          %v1325 = vpop.f32.mrb[0].mxu0
          %v1326 = vpop.f32.mrb[0].mxu0
          %v1327 = vadd.f32 0.0, %v1326
          %v1328 = vpop.f32.mrb[0].mxu0
          %1329 = vdwg.mxu0
          %v1331 = vsel %vm1149, %v1240, 0
          %1333 = vmatprep.subr.bf16.mxu0 0
          %1334 = vmatpush1.bf16.msra.mxu0 %v932
          %1335 = vmatprep.subr.bf16.mxu0 0
          %1336 = vmatpush1.bf16.msra.mxu0 0
          %1337 = vmatprep.subr.bf16.mxu0 0
          %1338 = vmatpush1.bf16.msra.mxu0 0
          %1339 = vmatprep.subr.bf16.mxu0 0
          %1340 = vmatpush1.bf16.msra.mxu0 0
          %1341 = vmatprep.subr.bf16.mxu0 0
          %1342 = vmatpush1.bf16.msra.mxu0 0
          %1343 = vmatprep.subr.bf16.mxu0 0
          %1344 = vmatpush1.bf16.msra.mxu0 0
          %1345 = vmatprep.subr.bf16.mxu0 0
          %1346 = vmatpush1.bf16.msra.mxu0 0
          %1347 = vmatprep.subr.bf16.mxu0 0
          %1348 = vmatpush1.bf16.msra.mxu0 0
          %1349 = vmatprep.subr.bf16.mxu0 0
          %1350 = vmatpush1.bf16.msra.mxu0 0
          %1351 = vmatprep.subr.bf16.mxu0 0
          %1352 = vmatpush1.bf16.msra.mxu0 0
          %1353 = vmatprep.subr.bf16.mxu0 0
          %1354 = vmatpush1.bf16.msra.mxu0 0
          %1355 = vmatprep.subr.bf16.mxu0 0
          %1356 = vmatpush1.bf16.msra.mxu0 0
          %1357 = vmatprep.subr.bf16.mxu0 0
          %1358 = vmatpush1.bf16.msra.mxu0 0
          %1359 = vmatprep.subr.bf16.mxu0 0
          %1360 = vmatpush1.bf16.msra.mxu0 0
          %1361 = vmatprep.subr.bf16.mxu0 0
          %1362 = vmatpush1.bf16.msra.mxu0 0
          %1363 = vmatprep.subr.bf16.mxu0 0
          %1364 = vmatpush1.bf16.msra.mxu0 0
          %1365 = vmatprep.mubr.bf16.mxu0 0
          %1366 = vmatmul.mubr.bf16.gmra.mrb[0].mxu0 %v1331
          %v1367 = vpop.f32.mrb[0].mxu0
          %v1368 = vadd.f32 0.0, %v1367
          %v1369 = vpop.f32.mrb[0].mxu0
          %v1370 = vpop.f32.mrb[0].mxu0
          %v1371 = vadd.f32 0.0, %v1370
          %v1372 = vpop.f32.mrb[0].mxu0
          %1373 = vdwg.mxu0
          %v1375 = vsel %vm1149, %v1241, 0
          %1377 = vmatprep.subr.bf16.mxu0 0
          %1378 = vmatpush1.bf16.msra.mxu0 %v933
          %1379 = vmatprep.subr.bf16.mxu0 0
          %1380 = vmatpush1.bf16.msra.mxu0 0
          %1381 = vmatprep.subr.bf16.mxu0 0
          %1382 = vmatpush1.bf16.msra.mxu0 0
          %1383 = vmatprep.subr.bf16.mxu0 0
          %1384 = vmatpush1.bf16.msra.mxu0 0
          %1385 = vmatprep.subr.bf16.mxu0 0
          %1386 = vmatpush1.bf16.msra.mxu0 0
          %1387 = vmatprep.subr.bf16.mxu0 0
          %1388 = vmatpush1.bf16.msra.mxu0 0
          %1389 = vmatprep.subr.bf16.mxu0 0
          %1390 = vmatpush1.bf16.msra.mxu0 0
          %1391 = vmatprep.subr.bf16.mxu0 0
          %1392 = vmatpush1.bf16.msra.mxu0 0
          %1393 = vmatprep.subr.bf16.mxu0 0
          %1394 = vmatpush1.bf16.msra.mxu0 0
          %1395 = vmatprep.subr.bf16.mxu0 0
          %1396 = vmatpush1.bf16.msra.mxu0 0
          %1397 = vmatprep.subr.bf16.mxu0 0
          %1398 = vmatpush1.bf16.msra.mxu0 0
          %1399 = vmatprep.subr.bf16.mxu0 0
          %1400 = vmatpush1.bf16.msra.mxu0 0
          %1401 = vmatprep.subr.bf16.mxu0 0
          %1402 = vmatpush1.bf16.msra.mxu0 0
          %1403 = vmatprep.subr.bf16.mxu0 0
          %1404 = vmatpush1.bf16.msra.mxu0 0
          %1405 = vmatprep.subr.bf16.mxu0 0
          %1406 = vmatpush1.bf16.msra.mxu0 0
          %1407 = vmatprep.subr.bf16.mxu0 0
          %1408 = vmatpush1.bf16.msra.mxu0 0
          %1409 = vmatprep.mubr.bf16.mxu0 0
          %1410 = vmatmul.mubr.bf16.gmra.mrb[0].mxu0 %v1375
          %v1411 = vpop.f32.mrb[0].mxu0
          %v1412 = vadd.f32 0.0, %v1411
          %v1413 = vpop.f32.mrb[0].mxu0
          %v1414 = vpop.f32.mrb[0].mxu0
          %v1415 = vadd.f32 0.0, %v1414
          %v1416 = vpop.f32.mrb[0].mxu0
          %1417 = vdwg.mxu0
          %v1418 = vpack.c.bf16 %v1283, %v1280
          %v1419 = vpack.c.bf16 %v1327, %v1324
          %v1420 = vpack.c.bf16 %v1371, %v1368
          %v1421 = vpack.c.bf16 %v1415, %v1412
          %v1422 = vld [vmem:[#allocation13] sm:$0xf]
          %v1423 = vld [vmem:[#allocation13 + $0x4] sm:$0xf]
          %v1424 = vld [vmem:[#allocation13 + $0x8] sm:$0xf]
          %v1425 = vld [vmem:[#allocation13 + $0xc] sm:$0xf]
          %v1426 = vld [vmem:[#allocation13 + $0x10] sm:$0xf]
          %v1427 = vld [vmem:[#allocation13 + $0x14] sm:$0xf]
          %v1428 = vld [vmem:[#allocation13 + $0x18] sm:$0xf]
          %v1429 = vld [vmem:[#allocation13 + $0x1c] sm:$0xf]
          %v1430 = vld [vmem:[#allocation13 + $0x20] sm:$0xf]
          %v1431 = vld [vmem:[#allocation13 + $0x24] sm:$0xf]
          %v1432 = vld [vmem:[#allocation13 + $0x28] sm:$0xf]
          %v1433 = vld [vmem:[#allocation13 + $0x2c] sm:$0xf]
          %v1434 = vld [vmem:[#allocation13 + $0x30] sm:$0xf]
          %v1435 = vld [vmem:[#allocation13 + $0x34] sm:$0xf]
          %v1436 = vld [vmem:[#allocation13 + $0x38] sm:$0xf]
          %v1437 = vld [vmem:[#allocation13 + $0x3c] sm:$0xf]
          %v1442 = vunpack.c.l.b16 %v1422
          %v1443 = vunpack.c.l.b16 %v1423
          %v1444 = vunpack.c.l.b16 %v1424
          %v1445 = vunpack.c.l.b16 %v1425
          %v1446 = vpack.c.b16 %v1443, %v1442
          %v1447 = vpack.c.b16 %v1445, %v1444
          %v1451 = vsel %vm868, %v1418, 0
          %1453 = vmatprep.subr.bf16.mxu0 0
          %1454 = vmatpush1.bf16.msra.mxu0 %v1446
          %1455 = vmatprep.subr.bf16.mxu0 0
          %1456 = vmatpush1.bf16.msra.mxu0 %v1447
          %1457 = vmatprep.subr.bf16.mxu0 0
          %1458 = vmatpush1.bf16.msra.mxu0 0
          %1459 = vmatprep.subr.bf16.mxu0 0
          %1460 = vmatpush1.bf16.msra.mxu0 0
          %1461 = vmatprep.subr.bf16.mxu0 0
          %1462 = vmatpush1.bf16.msra.mxu0 0
          %1463 = vmatprep.subr.bf16.mxu0 0
          %1464 = vmatpush1.bf16.msra.mxu0 0
          %1465 = vmatprep.subr.bf16.mxu0 0
          %1466 = vmatpush1.bf16.msra.mxu0 0
          %1467 = vmatprep.subr.bf16.mxu0 0
          %1468 = vmatpush1.bf16.msra.mxu0 0
          %1469 = vmatprep.subr.bf16.mxu0 0
          %1470 = vmatpush1.bf16.msra.mxu0 0
          %1471 = vmatprep.subr.bf16.mxu0 0
          %1472 = vmatpush1.bf16.msra.mxu0 0
          %1473 = vmatprep.subr.bf16.mxu0 0
          %1474 = vmatpush1.bf16.msra.mxu0 0
          %1475 = vmatprep.subr.bf16.mxu0 0
          %1476 = vmatpush1.bf16.msra.mxu0 0
          %1477 = vmatprep.subr.bf16.mxu0 0
          %1478 = vmatpush1.bf16.msra.mxu0 0
          %1479 = vmatprep.subr.bf16.mxu0 0
          %1480 = vmatpush1.bf16.msra.mxu0 0
          %1481 = vmatprep.subr.bf16.mxu0 0
          %1482 = vmatpush1.bf16.msra.mxu0 0
          %1483 = vmatprep.subr.bf16.mxu0 0
          %1484 = vmatpush1.bf16.msra.mxu0 0
          %1485 = vmatprep.mubr.bf16.mxu0 0
          %1486 = vmatmul.mubr.bf16.gmra.mrb[0].mxu0 %v1451
          %v1487 = vpop.f32.mrb[0].mxu0
          %v1488 = vadd.f32 0.0, %v1487
          %v1489 = vpop.f32.mrb[0].mxu0
          %v1490 = vpop.f32.mrb[0].mxu0
          %v1491 = vadd.f32 0.0, %v1490
          %v1492 = vpop.f32.mrb[0].mxu0
          %1493 = vdwg.mxu0
          %v1498 = vunpack.c.l.b16 %v1426
          %v1499 = vunpack.c.l.b16 %v1427
          %v1500 = vunpack.c.l.b16 %v1428
          %v1501 = vunpack.c.l.b16 %v1429
          %v1502 = vpack.c.b16 %v1499, %v1498
          %v1503 = vpack.c.b16 %v1501, %v1500
          %v1507 = vsel %vm868, %v1419, 0
          %1509 = vmatprep.subr.bf16.mxu0 0
          %1510 = vmatpush1.bf16.msra.mxu0 %v1502
          %1511 = vmatprep.subr.bf16.mxu0 0
          %1512 = vmatpush1.bf16.msra.mxu0 %v1503
          %1513 = vmatprep.subr.bf16.mxu0 0
          %1514 = vmatpush1.bf16.msra.mxu0 0
          %1515 = vmatprep.subr.bf16.mxu0 0
          %1516 = vmatpush1.bf16.msra.mxu0 0
          %1517 = vmatprep.subr.bf16.mxu0 0
          %1518 = vmatpush1.bf16.msra.mxu0 0
          %1519 = vmatprep.subr.bf16.mxu0 0
          %1520 = vmatpush1.bf16.msra.mxu0 0
          %1521 = vmatprep.subr.bf16.mxu0 0
          %1522 = vmatpush1.bf16.msra.mxu0 0
          %1523 = vmatprep.subr.bf16.mxu0 0
          %1524 = vmatpush1.bf16.msra.mxu0 0
          %1525 = vmatprep.subr.bf16.mxu0 0
          %1526 = vmatpush1.bf16.msra.mxu0 0
          %1527 = vmatprep.subr.bf16.mxu0 0
          %1528 = vmatpush1.bf16.msra.mxu0 0
          %1529 = vmatprep.subr.bf16.mxu0 0
          %1530 = vmatpush1.bf16.msra.mxu0 0
          %1531 = vmatprep.subr.bf16.mxu0 0
          %1532 = vmatpush1.bf16.msra.mxu0 0
          %1533 = vmatprep.subr.bf16.mxu0 0
          %1534 = vmatpush1.bf16.msra.mxu0 0
          %1535 = vmatprep.subr.bf16.mxu0 0
          %1536 = vmatpush1.bf16.msra.mxu0 0
          %1537 = vmatprep.subr.bf16.mxu0 0
          %1538 = vmatpush1.bf16.msra.mxu0 0
          %1539 = vmatprep.subr.bf16.mxu0 0
          %1540 = vmatpush1.bf16.msra.mxu0 0
          %1541 = vmatprep.mubr.bf16.mxu0 0
          %1542 = vmatmul.mubr.bf16.gmra.mrb[0].mxu0 %v1507
          %v1543 = vpop.f32.mrb[0].mxu0
          %v1544 = vadd.f32 0.0, %v1543
          %v1545 = vpop.f32.mrb[0].mxu0
          %v1546 = vpop.f32.mrb[0].mxu0
          %v1547 = vadd.f32 0.0, %v1546
          %v1548 = vpop.f32.mrb[0].mxu0
          %1549 = vdwg.mxu0
          %v1554 = vunpack.c.l.b16 %v1430
          %v1555 = vunpack.c.l.b16 %v1431
          %v1556 = vunpack.c.l.b16 %v1432
          %v1557 = vunpack.c.l.b16 %v1433
          %v1558 = vpack.c.b16 %v1555, %v1554
          %v1559 = vpack.c.b16 %v1557, %v1556
          %v1563 = vsel %vm868, %v1420, 0
          %1565 = vmatprep.subr.bf16.mxu0 0
          %1566 = vmatpush1.bf16.msra.mxu0 %v1558
          %1567 = vmatprep.subr.bf16.mxu0 0
          %1568 = vmatpush1.bf16.msra.mxu0 %v1559
          %1569 = vmatprep.subr.bf16.mxu0 0
          %1570 = vmatpush1.bf16.msra.mxu0 0
          %1571 = vmatprep.subr.bf16.mxu0 0
          %1572 = vmatpush1.bf16.msra.mxu0 0
          %1573 = vmatprep.subr.bf16.mxu0 0
          %1574 = vmatpush1.bf16.msra.mxu0 0
          %1575 = vmatprep.subr.bf16.mxu0 0
          %1576 = vmatpush1.bf16.msra.mxu0 0
          %1577 = vmatprep.subr.bf16.mxu0 0
          %1578 = vmatpush1.bf16.msra.mxu0 0
          %1579 = vmatprep.subr.bf16.mxu0 0
          %1580 = vmatpush1.bf16.msra.mxu0 0
          %1581 = vmatprep.subr.bf16.mxu0 0
          %1582 = vmatpush1.bf16.msra.mxu0 0
          %1583 = vmatprep.subr.bf16.mxu0 0
          %1584 = vmatpush1.bf16.msra.mxu0 0
          %1585 = vmatprep.subr.bf16.mxu0 0
          %1586 = vmatpush1.bf16.msra.mxu0 0
          %1587 = vmatprep.subr.bf16.mxu0 0
          %1588 = vmatpush1.bf16.msra.mxu0 0
          %1589 = vmatprep.subr.bf16.mxu0 0
          %1590 = vmatpush1.bf16.msra.mxu0 0
          %1591 = vmatprep.subr.bf16.mxu0 0
          %1592 = vmatpush1.bf16.msra.mxu0 0
          %1593 = vmatprep.subr.bf16.mxu0 0
          %1594 = vmatpush1.bf16.msra.mxu0 0
          %1595 = vmatprep.subr.bf16.mxu0 0
          %1596 = vmatpush1.bf16.msra.mxu0 0
          %1597 = vmatprep.mubr.bf16.mxu0 0
          %1598 = vmatmul.mubr.bf16.gmra.mrb[0].mxu0 %v1563
          %v1599 = vpop.f32.mrb[0].mxu0
          %v1600 = vadd.f32 0.0, %v1599
          %v1601 = vpop.f32.mrb[0].mxu0
          %v1602 = vpop.f32.mrb[0].mxu0
          %v1603 = vadd.f32 0.0, %v1602
          %v1604 = vpop.f32.mrb[0].mxu0
          %1605 = vdwg.mxu0
          %v1610 = vunpack.c.l.b16 %v1434
          %v1611 = vunpack.c.l.b16 %v1435
          %v1612 = vunpack.c.l.b16 %v1436
          %v1613 = vunpack.c.l.b16 %v1437
          %v1614 = vpack.c.b16 %v1611, %v1610
          %v1615 = vpack.c.b16 %v1613, %v1612
          %v1619 = vsel %vm868, %v1421, 0
          %1621 = vmatprep.subr.bf16.mxu0 0
          %1622 = vmatpush1.bf16.msra.mxu0 %v1614
          %1623 = vmatprep.subr.bf16.mxu0 0
          %1624 = vmatpush1.bf16.msra.mxu0 %v1615
          %1625 = vmatprep.subr.bf16.mxu0 0
          %1626 = vmatpush1.bf16.msra.mxu0 0
          %1627 = vmatprep.subr.bf16.mxu0 0
          %1628 = vmatpush1.bf16.msra.mxu0 0
          %1629 = vmatprep.subr.bf16.mxu0 0
          %1630 = vmatpush1.bf16.msra.mxu0 0
          %1631 = vmatprep.subr.bf16.mxu0 0
          %1632 = vmatpush1.bf16.msra.mxu0 0
          %1633 = vmatprep.subr.bf16.mxu0 0
          %1634 = vmatpush1.bf16.msra.mxu0 0
          %1635 = vmatprep.subr.bf16.mxu0 0
          %1636 = vmatpush1.bf16.msra.mxu0 0
          %1637 = vmatprep.subr.bf16.mxu0 0
          %1638 = vmatpush1.bf16.msra.mxu0 0
          %1639 = vmatprep.subr.bf16.mxu0 0
          %1640 = vmatpush1.bf16.msra.mxu0 0
          %1641 = vmatprep.subr.bf16.mxu0 0
          %1642 = vmatpush1.bf16.msra.mxu0 0
          %1643 = vmatprep.subr.bf16.mxu0 0
          %1644 = vmatpush1.bf16.msra.mxu0 0
          %1645 = vmatprep.subr.bf16.mxu0 0
          %1646 = vmatpush1.bf16.msra.mxu0 0
          %1647 = vmatprep.subr.bf16.mxu0 0
          %1648 = vmatpush1.bf16.msra.mxu0 0
          %1649 = vmatprep.subr.bf16.mxu0 0
          %1650 = vmatpush1.bf16.msra.mxu0 0
          %1651 = vmatprep.subr.bf16.mxu0 0
          %1652 = vmatpush1.bf16.msra.mxu0 0
          %1653 = vmatprep.mubr.bf16.mxu0 0
          %1654 = vmatmul.mubr.bf16.gmra.mrb[0].mxu0 %v1619
          %v1655 = vpop.f32.mrb[0].mxu0
          %v1656 = vadd.f32 0.0, %v1655
          %v1657 = vpop.f32.mrb[0].mxu0
          %v1658 = vpop.f32.mrb[0].mxu0
          %v1659 = vadd.f32 0.0, %v1658
          %v1660 = vpop.f32.mrb[0].mxu0
          %1661 = vdwg.mxu0
          %v1662 = vadd.f32 %v1488, %v1544
          %v1663 = vadd.f32 %v1662, %v1600
          %v1664 = vadd.f32 %v1663, %v1656
          %v1665 = vadd.f32 %v1491, %v1547
          %v1666 = vadd.f32 %v1665, %v1603
          %v1667 = vadd.f32 %v1666, %v1659
          %v1668 = vld [vmem:[%s4] sm:$0x1]
          %v1670 = vlaneseq
          %v1671 = vshrl.u32 %v1670, 7
          %v1672 = vsub.s32 0, %v1671
          %v1673 = vrot.slane %v1668, %v1672
          %v1675 = vadd.f32 %v1664, %v1673
          %v1676 = vadd.f32 %v1667, %v1673
          %v1677 = vadd.f32 %v603, %v1675
          %v1678 = vadd.f32 %v604, %v1676
          %v1679 = vld [vmem:[%s5] sm:$0x1]
          %v1680 = vld [vmem:[%s6] sm:$0x1]
          %1681 = vadd.xlane.f32.xlu0 %v1677
          %v1682 = vpop.xlane.xlu0 %1681
          %1683 = vadd.xlane.f32.xlu0 %v1678
          %v1684 = vpop.xlane.xlu0 %1683
          %v1685 = vrcp.pop 128.0
          %v1686 = vmul.f32 %v1682, %v1685
          %v1687 = vmul.f32 %v1684, %v1685
          %v1688 = vsub.f32 %v1677, %v1686
          %v1689 = vsub.f32 %v1678, %v1687
          %v1690 = vmul.f32 %v1688, %v1688
          %v1691 = vmul.f32 %v1689, %v1689
          %1692 = vadd.xlane.f32.xlu0 %v1690
          %v1693 = vpop.xlane.xlu0 %1692
          %1694 = vadd.xlane.f32.xlu0 %v1691
          %v1695 = vpop.xlane.xlu0 %1694
          %v1696 = vmul.f32 %v1693, %v1685
          %v1697 = vmul.f32 %v1695, %v1685
          %v1698 = vadd.f32 %v1696, 1e-05
          %v1699 = vadd.f32 %v1697, 1e-05
          %v1700 = vrsqrt.pop %v1698
          %v1701 = vrsqrt.pop %v1699
          %v1702 = vmul.f32 %v1688, %v1700
          %v1703 = vmul.f32 %v1689, %v1701
          %v1705 = vlaneseq
          %v1706 = vshrl.u32 %v1705, 7
          %v1707 = vsub.s32 0, %v1706
          %v1708 = vrot.slane %v1679, %v1707
          %v1710 = vmul.f32 %v1702, %v1708
          %v1711 = vmul.f32 %v1703, %v1708
          %v1713 = vlaneseq
          %v1714 = vshrl.u32 %v1713, 7
          %v1715 = vsub.s32 0, %v1714
          %v1716 = vrot.slane %v1680, %v1715
          %v1718 = vadd.f32 %v1710, %v1716
          %v1719 = vadd.f32 %v1711, %v1716
          %1720 = vst [vmem:[#allocation5] sm:$0xff] %v1718
          %1721 = vst [vmem:[#allocation5 + $0x8] sm:$0xff] %v1719
          %v1722 = vpack.c.bf16 %v1719, %v1718
          %1723 = vst [vmem:[#allocation6] sm:$0xff] %v1722
          %1724 = vst [vmem:[#allocation7] sm:$0xff] 0.0
          %1725 = vst [vmem:[#allocation7 + $0x8] sm:$0xff] 0.0
        $region96: #{tpu_custom_call.1} parent=71 // pred_fallthru
          _
        %v1726 = vld [vmem:[#allocation6] sm:$0xff]
        %v1727 = vld [vmem:[%s525] sm:$0xff]
        %v1728 = vld [vmem:[%s525 + $0x8] sm:$0xff]
        %v1729 = vld [vmem:[%s525 + $0x10] sm:$0xff]
        %v1730 = vld [vmem:[%s525 + $0x18] sm:$0xff]
        %v1731 = vld [vmem:[%s525 + $0x20] sm:$0xff]
        %v1732 = vld [vmem:[%s525 + $0x28] sm:$0xff]
        %v1733 = vld [vmem:[%s525 + $0x30] sm:$0xff]
        %v1734 = vld [vmem:[%s525 + $0x38] sm:$0xff]
        %v1735 = vld [vmem:[%s525 + $0x40] sm:$0xff]
        %v1736 = vld [vmem:[%s525 + $0x48] sm:$0xff]
        %v1737 = vld [vmem:[%s525 + $0x50] sm:$0xff]
        %v1738 = vld [vmem:[%s525 + $0x58] sm:$0xff]
        %v1739 = vld [vmem:[%s525 + $0x60] sm:$0xff]
        %v1740 = vld [vmem:[%s525 + $0x68] sm:$0xff]
        %v1741 = vld [vmem:[%s525 + $0x70] sm:$0xff]
        %v1742 = vld [vmem:[%s525 + $0x78] sm:$0xff]
        %v1743 = vld [vmem:[%s595] sm:$0x3]
        %v1745 = vlaneseq
        %v1746 = vshrl.u32 %v1745, 7
        %v1747 = vsub.s32 0, %v1746
        %v1748 = vrot.slane %v1743, %v1747
        %v1749 = vlaneseq
        %v1750 = vshrl.u32 %v1749, 7
        %v1751 = vsub.s32 1, %v1750
        %v1752 = vrot.slane %v1743, %v1751
        %v1771 = vunpack.c.l.b16 %v1727
        %v1772 = vunpack.c.h.b16 %v1727
        %v1773 = vunpack.c.l.b16 %v1728
        %v1774 = vunpack.c.h.b16 %v1728
        %v1775 = vunpack.c.l.b16 %v1729
        %v1776 = vunpack.c.h.b16 %v1729
        %v1777 = vunpack.c.l.b16 %v1730
        %v1778 = vunpack.c.h.b16 %v1730
        %v1779 = vunpack.c.l.b16 %v1731
        %v1780 = vunpack.c.h.b16 %v1731
        %v1781 = vunpack.c.l.b16 %v1732
        %v1782 = vunpack.c.h.b16 %v1732
        %v1783 = vunpack.c.l.b16 %v1733
        %v1784 = vunpack.c.h.b16 %v1733
        %v1785 = vunpack.c.l.b16 %v1734
        %v1786 = vunpack.c.h.b16 %v1734
        %v1787 = vunpack.c.l.b16 %v1735
        %v1788 = vunpack.c.h.b16 %v1735
        %v1789 = vunpack.c.l.b16 %v1736
        %v1790 = vunpack.c.h.b16 %v1736
        %v1791 = vunpack.c.l.b16 %v1737
        %v1792 = vunpack.c.h.b16 %v1737
        %v1793 = vunpack.c.l.b16 %v1738
        %v1794 = vunpack.c.h.b16 %v1738
        %v1795 = vunpack.c.l.b16 %v1739
        %v1796 = vunpack.c.h.b16 %v1739
        %v1797 = vunpack.c.l.b16 %v1740
        %v1798 = vunpack.c.h.b16 %v1740
        %v1799 = vunpack.c.l.b16 %v1741
        %v1800 = vunpack.c.h.b16 %v1741
        %v1801 = vunpack.c.l.b16 %v1742
        %v1802 = vunpack.c.h.b16 %v1742
        %v1803 = vpack.c.b16 %v1773, %v1771
        %v1804 = vpack.c.b16 %v1774, %v1772
        %v1805 = vpack.c.b16 %v1777, %v1775
        %v1806 = vpack.c.b16 %v1778, %v1776
        %v1807 = vpack.c.b16 %v1781, %v1779
        %v1808 = vpack.c.b16 %v1782, %v1780
        %v1809 = vpack.c.b16 %v1785, %v1783
        %v1810 = vpack.c.b16 %v1786, %v1784
        %v1811 = vpack.c.b16 %v1789, %v1787
        %v1812 = vpack.c.b16 %v1790, %v1788
        %v1813 = vpack.c.b16 %v1793, %v1791
        %v1814 = vpack.c.b16 %v1794, %v1792
        %v1815 = vpack.c.b16 %v1797, %v1795
        %v1816 = vpack.c.b16 %v1798, %v1796
        %v1817 = vpack.c.b16 %v1801, %v1799
        %v1818 = vpack.c.b16 %v1802, %v1800
        %1835 = vmatprep.subr.bf16.mxu0 %v1804
        %1836 = vmatpush1.bf16.msra.mxu0 %v1803
        %1837 = vmatprep.subr.bf16.mxu0 %v1806
        %1838 = vmatpush1.bf16.msra.mxu0 %v1805
        %1839 = vmatprep.subr.bf16.mxu0 %v1808
        %1840 = vmatpush1.bf16.msra.mxu0 %v1807
        %1841 = vmatprep.subr.bf16.mxu0 %v1810
        %1842 = vmatpush1.bf16.msra.mxu0 %v1809
        %1843 = vmatprep.subr.bf16.mxu0 %v1812
        %1844 = vmatpush1.bf16.msra.mxu0 %v1811
        %1845 = vmatprep.subr.bf16.mxu0 %v1814
        %1846 = vmatpush1.bf16.msra.mxu0 %v1813
        %1847 = vmatprep.subr.bf16.mxu0 %v1816
        %1848 = vmatpush1.bf16.msra.mxu0 %v1815
        %1849 = vmatprep.subr.bf16.mxu0 %v1818
        %1850 = vmatpush1.bf16.msra.mxu0 %v1817
        %1851 = vmatprep.subr.bf16.mxu0 0
        %1852 = vmatpush1.bf16.msra.mxu0 0
        %1853 = vmatprep.subr.bf16.mxu0 0
        %1854 = vmatpush1.bf16.msra.mxu0 0
        %1855 = vmatprep.subr.bf16.mxu0 0
        %1856 = vmatpush1.bf16.msra.mxu0 0
        %1857 = vmatprep.subr.bf16.mxu0 0
        %1858 = vmatpush1.bf16.msra.mxu0 0
        %1859 = vmatprep.subr.bf16.mxu0 0
        %1860 = vmatpush1.bf16.msra.mxu0 0
        %1861 = vmatprep.subr.bf16.mxu0 0
        %1862 = vmatpush1.bf16.msra.mxu0 0
        %1863 = vmatprep.subr.bf16.mxu0 0
        %1864 = vmatpush1.bf16.msra.mxu0 0
        %1865 = vmatprep.subr.bf16.mxu0 0
        %1866 = vmatpush1.bf16.msra.mxu0 0
        %1867 = vmatprep.mubr.bf16.mxu0 0
        %1868 = vmatmul.mubr.bf16.gmra.mrb[0].mxu0 %v1726
        %v1869 = vpop.f32.mrb[0].mxu0
        %v1870 = vadd.f32 %v1748, %v1869
        %v1871 = vpop.f32.mrb[0].mxu0
        %v1872 = vadd.f32 %v1752, %v1871
        %v1873 = vpop.f32.mrb[0].mxu0
        %v1874 = vadd.f32 %v1748, %v1873
        %v1875 = vpop.f32.mrb[0].mxu0
        %v1876 = vadd.f32 %v1752, %v1875
        %1877 = vdwg.mxu0
        %v1878 = vmax.f32 %v1870, 0.0
        %v1879 = vmax.f32 %v1872, 0.0
        %v1880 = vmax.f32 %v1874, 0.0
        %v1881 = vmax.f32 %v1876, 0.0
        %v1882 = vld [vmem:[#allocation7] sm:$0xff]
        %v1883 = vld [vmem:[#allocation7 + $0x8] sm:$0xff]
        %v1884 = vpack.c.bf16 %v1880, %v1878
        %v1885 = vpack.c.bf16 %v1881, %v1879
        %v1886 = vld [vmem:[%s534] sm:$0xf]
        %v1887 = vld [vmem:[%s534 + $0x4] sm:$0xf]
        %v1888 = vld [vmem:[%s534 + $0x8] sm:$0xf]
        %v1889 = vld [vmem:[%s534 + $0xc] sm:$0xf]
        %v1890 = vld [vmem:[%s534 + $0x10] sm:$0xf]
        %v1891 = vld [vmem:[%s534 + $0x14] sm:$0xf]
        %v1892 = vld [vmem:[%s534 + $0x18] sm:$0xf]
        %v1893 = vld [vmem:[%s534 + $0x1c] sm:$0xf]
        %v1894 = vld [vmem:[%s534 + $0x20] sm:$0xf]
        %v1895 = vld [vmem:[%s534 + $0x24] sm:$0xf]
        %v1896 = vld [vmem:[%s534 + $0x28] sm:$0xf]
        %v1897 = vld [vmem:[%s534 + $0x2c] sm:$0xf]
        %v1898 = vld [vmem:[%s534 + $0x30] sm:$0xf]
        %v1899 = vld [vmem:[%s534 + $0x34] sm:$0xf]
        %v1900 = vld [vmem:[%s534 + $0x38] sm:$0xf]
        %v1901 = vld [vmem:[%s534 + $0x3c] sm:$0xf]
        %v1902 = vld [vmem:[%s534 + $0x40] sm:$0xf]
        %v1903 = vld [vmem:[%s534 + $0x44] sm:$0xf]
        %v1904 = vld [vmem:[%s534 + $0x48] sm:$0xf]
        %v1905 = vld [vmem:[%s534 + $0x4c] sm:$0xf]
        %v1906 = vld [vmem:[%s534 + $0x50] sm:$0xf]
        %v1907 = vld [vmem:[%s534 + $0x54] sm:$0xf]
        %v1908 = vld [vmem:[%s534 + $0x58] sm:$0xf]
        %v1909 = vld [vmem:[%s534 + $0x5c] sm:$0xf]
        %v1910 = vld [vmem:[%s534 + $0x60] sm:$0xf]
        %v1911 = vld [vmem:[%s534 + $0x64] sm:$0xf]
        %v1912 = vld [vmem:[%s534 + $0x68] sm:$0xf]
        %v1913 = vld [vmem:[%s534 + $0x6c] sm:$0xf]
        %v1914 = vld [vmem:[%s534 + $0x70] sm:$0xf]
        %v1915 = vld [vmem:[%s534 + $0x74] sm:$0xf]
        %v1916 = vld [vmem:[%s534 + $0x78] sm:$0xf]
        %v1917 = vld [vmem:[%s534 + $0x7c] sm:$0xf]
        %v1950 = vunpack.c.l.b16 %v1886
        %v1951 = vunpack.c.l.b16 %v1887
        %v1952 = vunpack.c.l.b16 %v1888
        %v1953 = vunpack.c.l.b16 %v1889
        %v1954 = vunpack.c.l.b16 %v1890
        %v1955 = vunpack.c.l.b16 %v1891
        %v1956 = vunpack.c.l.b16 %v1892
        %v1957 = vunpack.c.l.b16 %v1893
        %v1958 = vunpack.c.l.b16 %v1894
        %v1959 = vunpack.c.l.b16 %v1895
        %v1960 = vunpack.c.l.b16 %v1896
        %v1961 = vunpack.c.l.b16 %v1897
        %v1962 = vunpack.c.l.b16 %v1898
        %v1963 = vunpack.c.l.b16 %v1899
        %v1964 = vunpack.c.l.b16 %v1900
        %v1965 = vunpack.c.l.b16 %v1901
        %v1966 = vunpack.c.l.b16 %v1902
        %v1967 = vunpack.c.l.b16 %v1903
        %v1968 = vunpack.c.l.b16 %v1904
        %v1969 = vunpack.c.l.b16 %v1905
        %v1970 = vunpack.c.l.b16 %v1906
        %v1971 = vunpack.c.l.b16 %v1907
        %v1972 = vunpack.c.l.b16 %v1908
        %v1973 = vunpack.c.l.b16 %v1909
        %v1974 = vunpack.c.l.b16 %v1910
        %v1975 = vunpack.c.l.b16 %v1911
        %v1976 = vunpack.c.l.b16 %v1912
        %v1977 = vunpack.c.l.b16 %v1913
        %v1978 = vunpack.c.l.b16 %v1914
        %v1979 = vunpack.c.l.b16 %v1915
        %v1980 = vunpack.c.l.b16 %v1916
        %v1981 = vunpack.c.l.b16 %v1917
        %v1982 = vpack.c.b16 %v1951, %v1950
        %v1983 = vpack.c.b16 %v1953, %v1952
        %v1984 = vpack.c.b16 %v1955, %v1954
        %v1985 = vpack.c.b16 %v1957, %v1956
        %v1986 = vpack.c.b16 %v1959, %v1958
        %v1987 = vpack.c.b16 %v1961, %v1960
        %v1988 = vpack.c.b16 %v1963, %v1962
        %v1989 = vpack.c.b16 %v1965, %v1964
        %v1990 = vpack.c.b16 %v1967, %v1966
        %v1991 = vpack.c.b16 %v1969, %v1968
        %v1992 = vpack.c.b16 %v1971, %v1970
        %v1993 = vpack.c.b16 %v1973, %v1972
        %v1994 = vpack.c.b16 %v1975, %v1974
        %v1995 = vpack.c.b16 %v1977, %v1976
        %v1996 = vpack.c.b16 %v1979, %v1978
        %v1997 = vpack.c.b16 %v1981, %v1980
        %2014 = vmatprep.subr.bf16.mxu0 0
        %2015 = vmatpush1.bf16.msra.mxu0 %v1982
        %2016 = vmatprep.subr.bf16.mxu0 0
        %2017 = vmatpush1.bf16.msra.mxu0 %v1983
        %2018 = vmatprep.subr.bf16.mxu0 0
        %2019 = vmatpush1.bf16.msra.mxu0 %v1984
        %2020 = vmatprep.subr.bf16.mxu0 0
        %2021 = vmatpush1.bf16.msra.mxu0 %v1985
        %2022 = vmatprep.subr.bf16.mxu0 0
        %2023 = vmatpush1.bf16.msra.mxu0 %v1986
        %2024 = vmatprep.subr.bf16.mxu0 0
        %2025 = vmatpush1.bf16.msra.mxu0 %v1987
        %2026 = vmatprep.subr.bf16.mxu0 0
        %2027 = vmatpush1.bf16.msra.mxu0 %v1988
        %2028 = vmatprep.subr.bf16.mxu0 0
        %2029 = vmatpush1.bf16.msra.mxu0 %v1989
        %2030 = vmatprep.subr.bf16.mxu0 0
        %2031 = vmatpush1.bf16.msra.mxu0 %v1990
        %2032 = vmatprep.subr.bf16.mxu0 0
        %2033 = vmatpush1.bf16.msra.mxu0 %v1991
        %2034 = vmatprep.subr.bf16.mxu0 0
        %2035 = vmatpush1.bf16.msra.mxu0 %v1992
        %2036 = vmatprep.subr.bf16.mxu0 0
        %2037 = vmatpush1.bf16.msra.mxu0 %v1993
        %2038 = vmatprep.subr.bf16.mxu0 0
        %2039 = vmatpush1.bf16.msra.mxu0 %v1994
        %2040 = vmatprep.subr.bf16.mxu0 0
        %2041 = vmatpush1.bf16.msra.mxu0 %v1995
        %2042 = vmatprep.subr.bf16.mxu0 0
        %2043 = vmatpush1.bf16.msra.mxu0 %v1996
        %2044 = vmatprep.subr.bf16.mxu0 0
        %2045 = vmatpush1.bf16.msra.mxu0 %v1997
        %2046 = vmatprep.mubr.bf16.mxu0 %v1885
        %2047 = vmatmul.mubr.bf16.gmra.mrb[0].mxu0 %v1884
        %v2048 = vpop.f32.mrb[0].mxu0
        %v2049 = vadd.f32 0.0, %v2048
        %v2050 = vpop.f32.mrb[0].mxu0
        %v2051 = vpop.f32.mrb[0].mxu0
        %v2052 = vadd.f32 0.0, %v2051
        %v2053 = vpop.f32.mrb[0].mxu0
        %2054 = vdwg.mxu0
        %v2055 = vadd.f32 %v1882, %v2049
        %v2056 = vadd.f32 %v1883, %v2052
        %2057 = vst [vmem:[#allocation7] sm:$0xff] %v2055
        %2058 = vst [vmem:[#allocation7 + $0x8] sm:$0xff] %v2056
        %p2059 = scmp.eq.s32.totalorder %s39, 1
        // Predicated region
        $region97: #{tpu_custom_call.1} parent=71 // pred_check
          %p2060 = pneg %p2059
        $region98: #{tpu_custom_call.1} parent=71 // pred_check_branch
          %2062 = sbr.rel (%p2060) target = $region100
        $region99: #{tpu_custom_call.1} parent=71 // pred_region
          %v2063 = vld [vmem:[#allocation5] sm:$0xff]
          %v2064 = vld [vmem:[#allocation5 + $0x8] sm:$0xff]
          %v2065 = vld [vmem:[#allocation7] sm:$0xff]
          %v2066 = vld [vmem:[#allocation7 + $0x8] sm:$0xff]
          %v2067 = vadd.f32 %v2063, %v2065
          %v2068 = vadd.f32 %v2064, %v2066
          %v2069 = vld [vmem:[%s10] sm:$0x1]
          %v2071 = vlaneseq
          %v2072 = vshrl.u32 %v2071, 7
          %v2073 = vsub.s32 0, %v2072
          %v2074 = vrot.slane %v2069, %v2073
          %v2076 = vadd.f32 %v2067, %v2074
          %v2077 = vadd.f32 %v2068, %v2074
          %v2078 = vld [vmem:[%s11] sm:$0x1]
          %v2079 = vld [vmem:[%s12] sm:$0x1]
          %2080 = vadd.xlane.f32.xlu0 %v2076
          %v2081 = vpop.xlane.xlu0 %2080
          %2082 = vadd.xlane.f32.xlu0 %v2077
          %v2083 = vpop.xlane.xlu0 %2082
          %v2084 = vrcp.pop 128.0
          %v2085 = vmul.f32 %v2081, %v2084
          %v2086 = vmul.f32 %v2083, %v2084
          %v2087 = vsub.f32 %v2076, %v2085
          %v2088 = vsub.f32 %v2077, %v2086
          %v2089 = vmul.f32 %v2087, %v2087
          %v2090 = vmul.f32 %v2088, %v2088
          %2091 = vadd.xlane.f32.xlu0 %v2089
          %v2092 = vpop.xlane.xlu0 %2091
          %2093 = vadd.xlane.f32.xlu0 %v2090
          %v2094 = vpop.xlane.xlu0 %2093
          %v2095 = vmul.f32 %v2092, %v2084
          %v2096 = vmul.f32 %v2094, %v2084
          %v2097 = vadd.f32 %v2095, 1e-05
          %v2098 = vadd.f32 %v2096, 1e-05
          %v2099 = vrsqrt.pop %v2097
          %v2100 = vrsqrt.pop %v2098
          %v2101 = vmul.f32 %v2087, %v2099
          %v2102 = vmul.f32 %v2088, %v2100
          %v2104 = vlaneseq
          %v2105 = vshrl.u32 %v2104, 7
          %v2106 = vsub.s32 0, %v2105
          %v2107 = vrot.slane %v2078, %v2106
          %v2109 = vmul.f32 %v2101, %v2107
          %v2110 = vmul.f32 %v2102, %v2107
          %v2112 = vlaneseq
          %v2113 = vshrl.u32 %v2112, 7
          %v2114 = vsub.s32 0, %v2113
          %v2115 = vrot.slane %v2079, %v2114
          %v2117 = vadd.f32 %v2109, %v2115
          %v2118 = vadd.f32 %v2110, %v2115
          %2119 = vst [vmem:[%s590] sm:$0xff] %v2117
          %2120 = vst [vmem:[%s590 + $0x8] sm:$0xff] %v2118
        $region100: #{tpu_custom_call.1} parent=71 // pred_fallthru
          _
        %s2121 = sand.u32 %s347, 1
        %s2122 = scalar_lea.sflag [#allocation10], %s2121
        %s2123 = sand.u32 %s347, 1
        %s2124 = smul.addr %s2123, 16
        %s2125 = scalar_lea.vmem [#allocation17], %s2124
        // Predicated region
        $region101: #{tpu_custom_call.1} parent=71 // pred_check
          %p2126 = pneg %p357
        $region102: #{tpu_custom_call.1} parent=71 // pred_check_branch
          %2128 = sbr.rel (%p2126) target = $region104
        $region103: #{tpu_custom_call.1} parent=71 // pred_region
          %s2130 = ssub.s32 256, 256
          %2131 = vsyncadd %s2122, %s2130
          %s2132 = smul.addr %s38, 2
          %s2133 = smul.addr %s2132, 128
          %s2134 = scalar_lea.hbm %s13, %s2133
          %s2135 = sshll.u32 %s2125, 4
          %s2136 = int_to_ptr.vmem [resolvable:$true] %s2135
          %2141 = dma.vmem_to_hbm [thread:$0]  %s2136, 256, %s2134, %s2122, 128, 128, 8
        $region104: #{tpu_custom_call.1} parent=71 // pred_fallthru
          _
      $region72: #{tpu_custom_call.1} parent=5 // pred_fallthru
        _
      %p2142 = scmp.le.s32.totalorder 2, %s29
      // Predicated region
      $region105: #{tpu_custom_call.1} parent=5 // pred_check
        %p2143 = pneg %p2142
      $region106: #{tpu_custom_call.1} parent=5 // pred_check_branch
        %2145 = sbr.rel (%p2143) target = $region108
      $region107: #{tpu_custom_call.1} parent=5 // pred_region
        %s2146 = ssub.s32 %s29, 2
        // Predicated region
        $region109: #{tpu_custom_call.1} parent=107 // pred_check
          %p2147 = pneg %p363
        $region110: #{tpu_custom_call.1} parent=107 // pred_check_branch
          %2149 = sbr.rel (%p2147) target = $region112
        $region111: #{tpu_custom_call.1} parent=107 // pred_region
          %s2150 = sand.u32 %s348, 1
          %s2151 = scalar_lea.sflag [#allocation10], %s2150
          %s2152 = sand.u32 %s348, 1
          %s2153 = smul.addr %s2152, 16
          %s2154 = scalar_lea.vmem [#allocation17], %s2153
          %2155 = dma.done %s2151, 256
        $region112: #{tpu_custom_call.1} parent=107 // pred_fallthru
          _
      $region108: #{tpu_custom_call.1} parent=5 // pred_fallthru
        _
    $region6: #{tpu_custom_call.1} parent=1 // loop_footer
      %s33 = sadd.s32 1, %s29
    $region7: #{tpu_custom_call.1} parent=1 // loop_footer_branch
      %28 = sbr.rel target = $region3
    $region8: #{tpu_custom_call.1} parent=1 // loop_exit
      _
    %2156 = vsyncpa [#allocation9], 1
    %s2157 = scalar_lea.sflag [#allocation9], 1
    %2158 = vsyncpa %s2157, 1
    %2159 = vsyncpa [#allocation12], 1
    %2160 = vsyncpa [#allocation15], 1
    %s2161 = scalar_lea.sflag [#allocation15], 1
    %2162 = vsyncpa %s2161, 1
    %2163 = vsyncpa [#allocation10], 1
    %s2164 = scalar_lea.sflag [#allocation10], 1
    %2165 = vsyncpa %s2164, 1

</llo_original>
